<compile_context>
chip_gen: v6e
topology: v6e:2x2x1
jax: 0.10.0
libtpu: 0.0.40
codegen_flags: <defaults>
</compile_context>

<pallas_src>
import functools

import jax
import jax.numpy as jnp
from jax.experimental import pallas as pl
from jax.experimental.pallas import tpu as pltpu

_LANES = 128
_SUBLANES = 8
_MIN_TILE = _SUBLANES * _LANES  # 1024 batch rows = one f32 vreg per feature


def _round_up(x, m):
    return (x + m - 1) // m * m


# ----------------------------------------------------------------------------
# Pallas kernel (feature-major, batch on the 128-lane axis)
# ----------------------------------------------------------------------------
def _dlrm_kernel(
    table_sizes,            # static tuple of python ints (bound via partial)
    xd_ref,                 # (num_dense, TBS, 128) f32   VMEM (tiled)
    xc_ref,                 # (num_cat,   TBS, 128) int32 VMEM (tiled)
    w1_ref, b1_ref,         # SMEM, flattened (num_dense*3,), (3,)
    w2_ref, b2_ref,         # SMEM, (3*2,), (2,)
    w3_ref, b3_ref,         # SMEM, ((2+2*num_cat)*4,), (4,)
    w4_ref, b4_ref,         # SMEM, (4*2,), (2,)
    w5_ref, b5_ref,         # SMEM, (2*1,), (1,)
    emb_ref,                # SMEM, (num_cat, 2*max_rows) f32 (row-major packed)
    out_ref,                # (TBS, 128) f32 VMEM (tiled, lane-dense)
):
    num_dense = xd_ref.shape[0]
    num_cat = xc_ref.shape[0]

    def linear(xs, w_ref, b_ref, n_in, n_out, relu):
        # xs: list of (TBS, 128) f32 arrays (one per input feature).
        outs = []
        for j in range(n_out):
            acc = xs[0] * w_ref[0 * n_out + j] + b_ref[j]
            for k in range(1, n_in):
                acc = acc + xs[k] * w_ref[k * n_out + j]
            if relu:
                acc = jnp.maximum(acc, 0.0)
            outs.append(acc)
        return outs

    # ---- bottom MLP: Linear(num_dense,3) -> ReLU -> Linear(3,2) -> ReLU ----
    xd = xd_ref[...]                                   # (num_dense, TBS, 128)
    xs = [xd[k] for k in range(num_dense)]
    h = linear(xs, w1_ref, b1_ref, num_dense, 3, relu=True)
    h = linear(h, w2_ref, b2_ref, 3, 2, relu=True)

    # ---- embedding gather via compare-select against SMEM tables ----
    # TODO(synk): the unrolled compare-select gather only makes sense for the
    # tiny tables of this module; large tables would need a DMA/take gather.
    xc = xc_ref[...]                                   # (num_cat, TBS, 128) i32
    z = list(h)                                        # concat([dense, embs])
    for t in range(num_cat):
        idx = xc[t]
        e0 = jnp.zeros_like(xs[0])
        e1 = jnp.zeros_like(xs[0])
        for r in range(table_sizes[t]):
            m = idx == r
            e0 = jnp.where(m, emb_ref[t, 2 * r + 0], e0)
            e1 = jnp.where(m, emb_ref[t, 2 * r + 1], e1)
        z.append(e0)
        z.append(e1)

    # ---- top MLP: Linear(2+2*num_cat,4)->ReLU->Linear(4,2)->ReLU->Linear(2,1)->Sigmoid
    t1 = linear(z, w3_ref, b3_ref, 2 + 2 * num_cat, 4, relu=True)
    t2 = linear(t1, w4_ref, b4_ref, 4, 2, relu=True)
    logits = linear(t2, w5_ref, b5_ref, 2, 1, relu=False)[0]   # (TBS, 128)
    out_ref[...] = jax.nn.sigmoid(logits).astype(out_ref.dtype)


# ----------------------------------------------------------------------------
# Wrapper: layout plumbing + pallas_call
# ----------------------------------------------------------------------------
def dlrm_forward(params, x_dense, x_cat, *, max_tile_rows=65536):
    """DLRM_Net.forward.  x_dense: (B, num_dense) f32, x_cat: (B, num_cat) int."""
    B, num_dense = x_dense.shape
    num_cat = x_cat.shape[1]
    table_sizes = tuple(int(t.shape[0]) for t in params["emb_tables"])

    # Tile sizing: multiples of 1024 rows (one f32 vreg per feature).  Balance
    # the rows across the minimal number of tiles so batch padding stays small
    # while per-grid-step overhead is amortised over large tiles.
    bp_min = _round_up(B, _MIN_TILE)
    n_tiles = pl.cdiv(bp_min, max_tile_rows)
    tb = _round_up(pl.cdiv(bp_min, n_tiles), _MIN_TILE)
    bp = tb * n_tiles
    tbs = tb // _LANES

    # Feature-major, lane-dense batch layout: (F, Bp//128, 128).
    def to_feature_major(x):
        xp = jnp.pad(x, ((0, bp - B), (0, 0)))
        return xp.T.reshape(x.shape[1], bp // _LANES, _LANES)

    xd_fm = to_feature_major(x_dense.astype(jnp.float32))
    xc_fm = to_feature_major(x_cat.astype(jnp.int32))

    # Flatten weights/biases (row-major) for SMEM scalar access; pack the
    # embedding tables into one (num_cat, 2*max_rows) SMEM array.
    flat = lambda a: a.reshape(-1)
    max_rows = max(table_sizes)
    emb_packed = jnp.zeros((num_cat, 2 * max_rows), jnp.float32)
    for t, tbl in enumerate(params["emb_tables"]):
        emb_packed = emb_packed.at[t, : 2 * table_sizes[t]].set(flat(tbl))

    smem = pl.BlockSpec(memory_space=pltpu.MemorySpace.SMEM)

    out = pl.pallas_call(
        functools.partial(_dlrm_kernel, table_sizes),
        grid=(n_tiles,),
        in_specs=[
            pl.BlockSpec((num_dense, tbs, _LANES), lambda i: (0, i, 0)),
            pl.BlockSpec((num_cat, tbs, _LANES), lambda i: (0, i, 0)),
        ] + [smem] * 11,
        out_specs=pl.BlockSpec((tbs, _LANES), lambda i: (i, 0)),
        out_shape=jax.ShapeDtypeStruct((bp // _LANES, _LANES), jnp.float32),
        compiler_params=pltpu.CompilerParams(
            dimension_semantics=("parallel",)),
    )(
        xd_fm, xc_fm,
        flat(params["w1"]), flat(params["b1"]),
        flat(params["w2"]), flat(params["b2"]),
        flat(params["w3"]), flat(params["b3"]),
        flat(params["w4"]), flat(params["b4"]),
        flat(params["w5"]), flat(params["b5"]),
        emb_packed,
    )
    # Feature-major slab (bp//128, 128) flattens back to batch order directly.
    return out.reshape(-1)[:B].reshape(B, 1)


# ----------------------------------------------------------------------------
# Deterministic parameter init (nn.Linear / nn.Embedding shapes).
# Weights stored pre-transposed: (in_features, out_features); biases (out,).
# ----------------------------------------------------------------------------
def init_params(key, num_dense_features, cat_embedding_sizes):
    num_cat = len(cat_embedding_sizes)
    keys = jax.random.split(key, 10 + num_cat)
    ki = iter(range(10 + num_cat))

    def linear(in_f, out_f):
        bound = 1.0 / jnp.sqrt(in_f)
        w = jax.random.uniform(keys[next(ki)], (in_f, out_f), jnp.float32, -bound, bound)
        b = jax.random.uniform(keys[next(ki)], (out_f,), jnp.float32, -bound, bound)
        return w, b

    w1, b1 = linear(num_dense_features, 3)
    w2, b2 = linear(3, 2)
    w3, b3 = linear(2 * num_cat + 2, 4)
    w4, b4 = linear(4, 2)
    w5, b5 = linear(2, 1)

    emb_tables = [
        jax.random.normal(keys[next(ki)], (n, 2), jnp.float32)
        for n in cat_embedding_sizes
    ]

    return {
        "w1": w1, "b1": b1, "w2": w2, "b2": b2,
        "w3": w3, "b3": b3, "w4": w4, "b4": b4,
        "w5": w5, "b5": b5,
        "emb_tables": emb_tables,
    }


def dlrm_reference(params, x_dense, x_cat):
    """Pure-JAX reference mirroring the PyTorch forward (for verification)."""
    h = jnp.maximum(x_dense @ params["w1"] + params["b1"], 0.0)
    h = jnp.maximum(h @ params["w2"] + params["b2"], 0.0)
    embs = [tbl[x_cat[:, i]] for i, tbl in enumerate(params["emb_tables"])]
    z = jnp.concatenate([h] + embs, axis=1)
    t = jnp.maximum(z @ params["w3"] + params["b3"], 0.0)
    t = jnp.maximum(t @ params["w4"] + params["b4"], 0.0)
    return jax.nn.sigmoid(t @ params["w5"] + params["b5"])


if __name__ == "__main__":
    num_dense_features = 4
    cat_embedding_sizes = [5, 7, 11]
    batch = 8

    key = jax.random.PRNGKey(0)
    k_param, k_dense, k_cat = jax.random.split(key, 3)

    params = init_params(k_param, num_dense_features, cat_embedding_sizes)
    x_dense = jax.random.normal(k_dense, (batch, num_dense_features), jnp.float32)
    x_cat = jnp.stack(
        [
            jax.random.randint(jax.random.fold_in(k_cat, i), (batch,), 0, n, jnp.int32)
            for i, n in enumerate(cat_embedding_sizes)
        ],
        axis=1,
    )  # (batch, num_cat) int32 indices

    out = dlrm_forward(params, x_dense, x_cat)
    out = jax.block_until_ready(out)

    ref = dlrm_reference(params, x_dense, x_cat)
    assert out.shape == (batch, 1)
    assert jnp.allclose(out, ref, atol=1e-5, rtol=1e-5), (out, ref)

    print("KERNEL_OK")
</pallas_src>

<mosaic_0001>
module attributes {stable_mosaic.version = 11 : i64} {
  func.func @_dlrm_kernel(%arg0: i32, %arg1: memref<4x8x128xf32, #tpu.memory_space<vmem>>, %arg2: memref<3x8x128xi32, #tpu.memory_space<vmem>>, %arg3: memref<12xf32, #tpu.memory_space<smem>>, %arg4: memref<3xf32, #tpu.memory_space<smem>>, %arg5: memref<6xf32, #tpu.memory_space<smem>>, %arg6: memref<2xf32, #tpu.memory_space<smem>>, %arg7: memref<32xf32, #tpu.memory_space<smem>>, %arg8: memref<4xf32, #tpu.memory_space<smem>>, %arg9: memref<8xf32, #tpu.memory_space<smem>>, %arg10: memref<2xf32, #tpu.memory_space<smem>>, %arg11: memref<2xf32, #tpu.memory_space<smem>>, %arg12: memref<1xf32, #tpu.memory_space<smem>>, %arg13: memref<3x22xf32, #tpu.memory_space<smem>>, %arg14: memref<8x128xf32, #tpu.memory_space<vmem>>) attributes {dimension_semantics = [#tpu.dimension_semantics<parallel>], iteration_bounds = array<i64: 1>, scalar_prefetch = 0 : i64, scratch_operands = 0 : i64, tpu.core_type = #tpu.core_type<tc>, window_params = [{transform_indices = @transform_0, window_bounds = array<i64: 4, 8, 128>}, {transform_indices = @transform_1, window_bounds = array<i64: 3, 8, 128>}, {transform_indices = @transform_2, window_bounds = array<i64: 12>}, {transform_indices = @transform_3, window_bounds = array<i64: 3>}, {transform_indices = @transform_4, window_bounds = array<i64: 6>}, {transform_indices = @transform_5, window_bounds = array<i64: 2>}, {transform_indices = @transform_6, window_bounds = array<i64: 32>}, {transform_indices = @transform_7, window_bounds = array<i64: 4>}, {transform_indices = @transform_8, window_bounds = array<i64: 8>}, {transform_indices = @transform_9, window_bounds = array<i64: 2>}, {transform_indices = @transform_10, window_bounds = array<i64: 2>}, {transform_indices = @transform_11, window_bounds = array<i64: 1>}, {transform_indices = @transform_12, window_bounds = array<i64: 3, 22>}, {transform_indices = @transform_13, window_bounds = array<i64: 8, 128>}]} {
    %c0 = arith.constant 0 : index
    %c0_0 = arith.constant 0 : index
    %c0_1 = arith.constant 0 : index
    %0 = vector.load %arg1[%c0, %c0_0, %c0_1] : memref<4x8x128xf32, #tpu.memory_space<vmem>>, vector<4x8x128xf32>
    %1 = vector.extract_strided_slice %0 {offsets = [0, 0, 0], sizes = [1, 8, 128], strides = [1, 1, 1]} : vector<4x8x128xf32> to vector<1x8x128xf32>
    %2 = vector.shape_cast %1 : vector<1x8x128xf32> to vector<8x128xf32>
    %3 = vector.extract_strided_slice %0 {offsets = [1, 0, 0], sizes = [1, 8, 128], strides = [1, 1, 1]} : vector<4x8x128xf32> to vector<1x8x128xf32>
    %4 = vector.shape_cast %3 : vector<1x8x128xf32> to vector<8x128xf32>
    %5 = vector.extract_strided_slice %0 {offsets = [2, 0, 0], sizes = [1, 8, 128], strides = [1, 1, 1]} : vector<4x8x128xf32> to vector<1x8x128xf32>
    %6 = vector.shape_cast %5 : vector<1x8x128xf32> to vector<8x128xf32>
    %7 = vector.extract_strided_slice %0 {offsets = [3, 0, 0], sizes = [1, 8, 128], strides = [1, 1, 1]} : vector<4x8x128xf32> to vector<1x8x128xf32>
    %8 = vector.shape_cast %7 : vector<1x8x128xf32> to vector<8x128xf32>
    %c0_2 = arith.constant 0 : index
    %9 = memref.load %arg3[%c0_2] : memref<12xf32, #tpu.memory_space<smem>>
    %10 = vector.broadcast %9 : f32 to vector<8x128xf32>
    %11 = arith.mulf %2, %10 : vector<8x128xf32>
    %c0_3 = arith.constant 0 : index
    %12 = memref.load %arg4[%c0_3] : memref<3xf32, #tpu.memory_space<smem>>
    %13 = vector.broadcast %12 : f32 to vector<8x128xf32>
    %14 = arith.addf %11, %13 : vector<8x128xf32>
    %c3 = arith.constant 3 : index
    %15 = memref.load %arg3[%c3] : memref<12xf32, #tpu.memory_space<smem>>
    %16 = vector.broadcast %15 : f32 to vector<8x128xf32>
    %17 = arith.mulf %4, %16 : vector<8x128xf32>
    %18 = arith.addf %14, %17 : vector<8x128xf32>
    %c6 = arith.constant 6 : index
    %19 = memref.load %arg3[%c6] : memref<12xf32, #tpu.memory_space<smem>>
    %20 = vector.broadcast %19 : f32 to vector<8x128xf32>
    %21 = arith.mulf %6, %20 : vector<8x128xf32>
    %22 = arith.addf %18, %21 : vector<8x128xf32>
    %c9 = arith.constant 9 : index
    %23 = memref.load %arg3[%c9] : memref<12xf32, #tpu.memory_space<smem>>
    %24 = vector.broadcast %23 : f32 to vector<8x128xf32>
    %25 = arith.mulf %8, %24 : vector<8x128xf32>
    %26 = arith.addf %22, %25 : vector<8x128xf32>
    %cst = arith.constant 0.000000e+00 : f32
    %27 = vector.broadcast %cst : f32 to vector<8x128xf32>
    %28 = arith.maximumf %26, %27 : vector<8x128xf32>
    %c1 = arith.constant 1 : index
    %29 = memref.load %arg3[%c1] : memref<12xf32, #tpu.memory_space<smem>>
    %30 = vector.broadcast %29 : f32 to vector<8x128xf32>
    %31 = arith.mulf %2, %30 : vector<8x128xf32>
    %c1_4 = arith.constant 1 : index
    %32 = memref.load %arg4[%c1_4] : memref<3xf32, #tpu.memory_space<smem>>
    %33 = vector.broadcast %32 : f32 to vector<8x128xf32>
    %34 = arith.addf %31, %33 : vector<8x128xf32>
    %c4 = arith.constant 4 : index
    %35 = memref.load %arg3[%c4] : memref<12xf32, #tpu.memory_space<smem>>
    %36 = vector.broadcast %35 : f32 to vector<8x128xf32>
    %37 = arith.mulf %4, %36 : vector<8x128xf32>
    %38 = arith.addf %34, %37 : vector<8x128xf32>
    %c7 = arith.constant 7 : index
    %39 = memref.load %arg3[%c7] : memref<12xf32, #tpu.memory_space<smem>>
    %40 = vector.broadcast %39 : f32 to vector<8x128xf32>
    %41 = arith.mulf %6, %40 : vector<8x128xf32>
    %42 = arith.addf %38, %41 : vector<8x128xf32>
    %c10 = arith.constant 10 : index
    %43 = memref.load %arg3[%c10] : memref<12xf32, #tpu.memory_space<smem>>
    %44 = vector.broadcast %43 : f32 to vector<8x128xf32>
    %45 = arith.mulf %8, %44 : vector<8x128xf32>
    %46 = arith.addf %42, %45 : vector<8x128xf32>
    %cst_5 = arith.constant 0.000000e+00 : f32
    %47 = vector.broadcast %cst_5 : f32 to vector<8x128xf32>
    %48 = arith.maximumf %46, %47 : vector<8x128xf32>
    %c2 = arith.constant 2 : index
    %49 = memref.load %arg3[%c2] : memref<12xf32, #tpu.memory_space<smem>>
    %50 = vector.broadcast %49 : f32 to vector<8x128xf32>
    %51 = arith.mulf %2, %50 : vector<8x128xf32>
    %c2_6 = arith.constant 2 : index
    %52 = memref.load %arg4[%c2_6] : memref<3xf32, #tpu.memory_space<smem>>
    %53 = vector.broadcast %52 : f32 to vector<8x128xf32>
    %54 = arith.addf %51, %53 : vector<8x128xf32>
    %c5 = arith.constant 5 : index
    %55 = memref.load %arg3[%c5] : memref<12xf32, #tpu.memory_space<smem>>
    %56 = vector.broadcast %55 : f32 to vector<8x128xf32>
    %57 = arith.mulf %4, %56 : vector<8x128xf32>
    %58 = arith.addf %54, %57 : vector<8x128xf32>
    %c8 = arith.constant 8 : index
    %59 = memref.load %arg3[%c8] : memref<12xf32, #tpu.memory_space<smem>>
    %60 = vector.broadcast %59 : f32 to vector<8x128xf32>
    %61 = arith.mulf %6, %60 : vector<8x128xf32>
    %62 = arith.addf %58, %61 : vector<8x128xf32>
    %c11 = arith.constant 11 : index
    %63 = memref.load %arg3[%c11] : memref<12xf32, #tpu.memory_space<smem>>
    %64 = vector.broadcast %63 : f32 to vector<8x128xf32>
    %65 = arith.mulf %8, %64 : vector<8x128xf32>
    %66 = arith.addf %62, %65 : vector<8x128xf32>
    %cst_7 = arith.constant 0.000000e+00 : f32
    %67 = vector.broadcast %cst_7 : f32 to vector<8x128xf32>
    %68 = arith.maximumf %66, %67 : vector<8x128xf32>
    %c0_8 = arith.constant 0 : index
    %69 = memref.load %arg5[%c0_8] : memref<6xf32, #tpu.memory_space<smem>>
    %70 = vector.broadcast %69 : f32 to vector<8x128xf32>
    %71 = arith.mulf %28, %70 : vector<8x128xf32>
    %c0_9 = arith.constant 0 : index
    %72 = memref.load %arg6[%c0_9] : memref<2xf32, #tpu.memory_space<smem>>
    %73 = vector.broadcast %72 : f32 to vector<8x128xf32>
    %74 = arith.addf %71, %73 : vector<8x128xf32>
    %c2_10 = arith.constant 2 : index
    %75 = memref.load %arg5[%c2_10] : memref<6xf32, #tpu.memory_space<smem>>
    %76 = vector.broadcast %75 : f32 to vector<8x128xf32>
    %77 = arith.mulf %48, %76 : vector<8x128xf32>
    %78 = arith.addf %74, %77 : vector<8x128xf32>
    %c4_11 = arith.constant 4 : index
    %79 = memref.load %arg5[%c4_11] : memref<6xf32, #tpu.memory_space<smem>>
    %80 = vector.broadcast %79 : f32 to vector<8x128xf32>
    %81 = arith.mulf %68, %80 : vector<8x128xf32>
    %82 = arith.addf %78, %81 : vector<8x128xf32>
    %cst_12 = arith.constant 0.000000e+00 : f32
    %83 = vector.broadcast %cst_12 : f32 to vector<8x128xf32>
    %84 = arith.maximumf %82, %83 : vector<8x128xf32>
    %c1_13 = arith.constant 1 : index
    %85 = memref.load %arg5[%c1_13] : memref<6xf32, #tpu.memory_space<smem>>
    %86 = vector.broadcast %85 : f32 to vector<8x128xf32>
    %87 = arith.mulf %28, %86 : vector<8x128xf32>
    %c1_14 = arith.constant 1 : index
    %88 = memref.load %arg6[%c1_14] : memref<2xf32, #tpu.memory_space<smem>>
    %89 = vector.broadcast %88 : f32 to vector<8x128xf32>
    %90 = arith.addf %87, %89 : vector<8x128xf32>
    %c3_15 = arith.constant 3 : index
    %91 = memref.load %arg5[%c3_15] : memref<6xf32, #tpu.memory_space<smem>>
    %92 = vector.broadcast %91 : f32 to vector<8x128xf32>
    %93 = arith.mulf %48, %92 : vector<8x128xf32>
    %94 = arith.addf %90, %93 : vector<8x128xf32>
    %c5_16 = arith.constant 5 : index
    %95 = memref.load %arg5[%c5_16] : memref<6xf32, #tpu.memory_space<smem>>
    %96 = vector.broadcast %95 : f32 to vector<8x128xf32>
    %97 = arith.mulf %68, %96 : vector<8x128xf32>
    %98 = arith.addf %94, %97 : vector<8x128xf32>
    %cst_17 = arith.constant 0.000000e+00 : f32
    %99 = vector.broadcast %cst_17 : f32 to vector<8x128xf32>
    %100 = arith.maximumf %98, %99 : vector<8x128xf32>
    %c0_18 = arith.constant 0 : index
    %c0_19 = arith.constant 0 : index
    %c0_20 = arith.constant 0 : index
    %101 = vector.load %arg2[%c0_18, %c0_19, %c0_20] : memref<3x8x128xi32, #tpu.memory_space<vmem>>, vector<3x8x128xi32>
    %102 = vector.extract_strided_slice %101 {offsets = [0, 0, 0], sizes = [1, 8, 128], strides = [1, 1, 1]} : vector<3x8x128xi32> to vector<1x8x128xi32>
    %103 = vector.shape_cast %102 : vector<1x8x128xi32> to vector<8x128xi32>
    %cst_21 = arith.constant 0.000000e+00 : f32
    %104 = vector.broadcast %cst_21 : f32 to vector<8x128xf32>
    %cst_22 = arith.constant 0.000000e+00 : f32
    %105 = vector.broadcast %cst_22 : f32 to vector<8x128xf32>
    %c0_i32 = arith.constant 0 : i32
    %106 = vector.broadcast %c0_i32 : i32 to vector<8x128xi32>
    %107 = arith.cmpi eq, %103, %106 : vector<8x128xi32>
    %c0_23 = arith.constant 0 : index
    %c0_24 = arith.constant 0 : index
    %108 = memref.load %arg13[%c0_23, %c0_24] : memref<3x22xf32, #tpu.memory_space<smem>>
    %109 = vector.broadcast %108 : f32 to vector<8x128xf32>
    %110 = arith.select %107, %109, %104 : vector<8x128xi1>, vector<8x128xf32>
    %c0_25 = arith.constant 0 : index
    %c1_26 = arith.constant 1 : index
    %111 = memref.load %arg13[%c0_25, %c1_26] : memref<3x22xf32, #tpu.memory_space<smem>>
    %112 = vector.broadcast %111 : f32 to vector<8x128xf32>
    %113 = arith.select %107, %112, %105 : vector<8x128xi1>, vector<8x128xf32>
    %c1_i32 = arith.constant 1 : i32
    %114 = vector.broadcast %c1_i32 : i32 to vector<8x128xi32>
    %115 = arith.cmpi eq, %103, %114 : vector<8x128xi32>
    %c0_27 = arith.constant 0 : index
    %c2_28 = arith.constant 2 : index
    %116 = memref.load %arg13[%c0_27, %c2_28] : memref<3x22xf32, #tpu.memory_space<smem>>
    %117 = vector.broadcast %116 : f32 to vector<8x128xf32>
    %118 = arith.select %115, %117, %110 : vector<8x128xi1>, vector<8x128xf32>
    %c0_29 = arith.constant 0 : index
    %c3_30 = arith.constant 3 : index
    %119 = memref.load %arg13[%c0_29, %c3_30] : memref<3x22xf32, #tpu.memory_space<smem>>
    %120 = vector.broadcast %119 : f32 to vector<8x128xf32>
    %121 = arith.select %115, %120, %113 : vector<8x128xi1>, vector<8x128xf32>
    %c2_i32 = arith.constant 2 : i32
    %122 = vector.broadcast %c2_i32 : i32 to vector<8x128xi32>
    %123 = arith.cmpi eq, %103, %122 : vector<8x128xi32>
    %c0_31 = arith.constant 0 : index
    %c4_32 = arith.constant 4 : index
    %124 = memref.load %arg13[%c0_31, %c4_32] : memref<3x22xf32, #tpu.memory_space<smem>>
    %125 = vector.broadcast %124 : f32 to vector<8x128xf32>
    %126 = arith.select %123, %125, %118 : vector<8x128xi1>, vector<8x128xf32>
    %c0_33 = arith.constant 0 : index
    %c5_34 = arith.constant 5 : index
    %127 = memref.load %arg13[%c0_33, %c5_34] : memref<3x22xf32, #tpu.memory_space<smem>>
    %128 = vector.broadcast %127 : f32 to vector<8x128xf32>
    %129 = arith.select %123, %128, %121 : vector<8x128xi1>, vector<8x128xf32>
    %c3_i32 = arith.constant 3 : i32
    %130 = vector.broadcast %c3_i32 : i32 to vector<8x128xi32>
    %131 = arith.cmpi eq, %103, %130 : vector<8x128xi32>
    %c0_35 = arith.constant 0 : index
    %c6_36 = arith.constant 6 : index
    %132 = memref.load %arg13[%c0_35, %c6_36] : memref<3x22xf32, #tpu.memory_space<smem>>
    %133 = vector.broadcast %132 : f32 to vector<8x128xf32>
    %134 = arith.select %131, %133, %126 : vector<8x128xi1>, vector<8x128xf32>
    %c0_37 = arith.constant 0 : index
    %c7_38 = arith.constant 7 : index
    %135 = memref.load %arg13[%c0_37, %c7_38] : memref<3x22xf32, #tpu.memory_space<smem>>
    %136 = vector.broadcast %135 : f32 to vector<8x128xf32>
    %137 = arith.select %131, %136, %129 : vector<8x128xi1>, vector<8x128xf32>
    %c4_i32 = arith.constant 4 : i32
    %138 = vector.broadcast %c4_i32 : i32 to vector<8x128xi32>
    %139 = arith.cmpi eq, %103, %138 : vector<8x128xi32>
    %c0_39 = arith.constant 0 : index
    %c8_40 = arith.constant 8 : index
    %140 = memref.load %arg13[%c0_39, %c8_40] : memref<3x22xf32, #tpu.memory_space<smem>>
    %141 = vector.broadcast %140 : f32 to vector<8x128xf32>
    %142 = arith.select %139, %141, %134 : vector<8x128xi1>, vector<8x128xf32>
    %c0_41 = arith.constant 0 : index
    %c9_42 = arith.constant 9 : index
    %143 = memref.load %arg13[%c0_41, %c9_42] : memref<3x22xf32, #tpu.memory_space<smem>>
    %144 = vector.broadcast %143 : f32 to vector<8x128xf32>
    %145 = arith.select %139, %144, %137 : vector<8x128xi1>, vector<8x128xf32>
    %146 = vector.extract_strided_slice %101 {offsets = [1, 0, 0], sizes = [1, 8, 128], strides = [1, 1, 1]} : vector<3x8x128xi32> to vector<1x8x128xi32>
    %147 = vector.shape_cast %146 : vector<1x8x128xi32> to vector<8x128xi32>
    %cst_43 = arith.constant 0.000000e+00 : f32
    %148 = vector.broadcast %cst_43 : f32 to vector<8x128xf32>
    %cst_44 = arith.constant 0.000000e+00 : f32
    %149 = vector.broadcast %cst_44 : f32 to vector<8x128xf32>
    %c0_i32_45 = arith.constant 0 : i32
    %150 = vector.broadcast %c0_i32_45 : i32 to vector<8x128xi32>
    %151 = arith.cmpi eq, %147, %150 : vector<8x128xi32>
    %c1_46 = arith.constant 1 : index
    %c0_47 = arith.constant 0 : index
    %152 = memref.load %arg13[%c1_46, %c0_47] : memref<3x22xf32, #tpu.memory_space<smem>>
    %153 = vector.broadcast %152 : f32 to vector<8x128xf32>
    %154 = arith.select %151, %153, %148 : vector<8x128xi1>, vector<8x128xf32>
    %c1_48 = arith.constant 1 : index
    %c1_49 = arith.constant 1 : index
    %155 = memref.load %arg13[%c1_48, %c1_49] : memref<3x22xf32, #tpu.memory_space<smem>>
    %156 = vector.broadcast %155 : f32 to vector<8x128xf32>
    %157 = arith.select %151, %156, %149 : vector<8x128xi1>, vector<8x128xf32>
    %c1_i32_50 = arith.constant 1 : i32
    %158 = vector.broadcast %c1_i32_50 : i32 to vector<8x128xi32>
    %159 = arith.cmpi eq, %147, %158 : vector<8x128xi32>
    %c1_51 = arith.constant 1 : index
    %c2_52 = arith.constant 2 : index
    %160 = memref.load %arg13[%c1_51, %c2_52] : memref<3x22xf32, #tpu.memory_space<smem>>
    %161 = vector.broadcast %160 : f32 to vector<8x128xf32>
    %162 = arith.select %159, %161, %154 : vector<8x128xi1>, vector<8x128xf32>
    %c1_53 = arith.constant 1 : index
    %c3_54 = arith.constant 3 : index
    %163 = memref.load %arg13[%c1_53, %c3_54] : memref<3x22xf32, #tpu.memory_space<smem>>
    %164 = vector.broadcast %163 : f32 to vector<8x128xf32>
    %165 = arith.select %159, %164, %157 : vector<8x128xi1>, vector<8x128xf32>
    %c2_i32_55 = arith.constant 2 : i32
    %166 = vector.broadcast %c2_i32_55 : i32 to vector<8x128xi32>
    %167 = arith.cmpi eq, %147, %166 : vector<8x128xi32>
    %c1_56 = arith.constant 1 : index
    %c4_57 = arith.constant 4 : index
    %168 = memref.load %arg13[%c1_56, %c4_57] : memref<3x22xf32, #tpu.memory_space<smem>>
    %169 = vector.broadcast %168 : f32 to vector<8x128xf32>
    %170 = arith.select %167, %169, %162 : vector<8x128xi1>, vector<8x128xf32>
    %c1_58 = arith.constant 1 : index
    %c5_59 = arith.constant 5 : index
    %171 = memref.load %arg13[%c1_58, %c5_59] : memref<3x22xf32, #tpu.memory_space<smem>>
    %172 = vector.broadcast %171 : f32 to vector<8x128xf32>
    %173 = arith.select %167, %172, %165 : vector<8x128xi1>, vector<8x128xf32>
    %c3_i32_60 = arith.constant 3 : i32
    %174 = vector.broadcast %c3_i32_60 : i32 to vector<8x128xi32>
    %175 = arith.cmpi eq, %147, %174 : vector<8x128xi32>
    %c1_61 = arith.constant 1 : index
    %c6_62 = arith.constant 6 : index
    %176 = memref.load %arg13[%c1_61, %c6_62] : memref<3x22xf32, #tpu.memory_space<smem>>
    %177 = vector.broadcast %176 : f32 to vector<8x128xf32>
    %178 = arith.select %175, %177, %170 : vector<8x128xi1>, vector<8x128xf32>
    %c1_63 = arith.constant 1 : index
    %c7_64 = arith.constant 7 : index
    %179 = memref.load %arg13[%c1_63, %c7_64] : memref<3x22xf32, #tpu.memory_space<smem>>
    %180 = vector.broadcast %179 : f32 to vector<8x128xf32>
    %181 = arith.select %175, %180, %173 : vector<8x128xi1>, vector<8x128xf32>
    %c4_i32_65 = arith.constant 4 : i32
    %182 = vector.broadcast %c4_i32_65 : i32 to vector<8x128xi32>
    %183 = arith.cmpi eq, %147, %182 : vector<8x128xi32>
    %c1_66 = arith.constant 1 : index
    %c8_67 = arith.constant 8 : index
    %184 = memref.load %arg13[%c1_66, %c8_67] : memref<3x22xf32, #tpu.memory_space<smem>>
    %185 = vector.broadcast %184 : f32 to vector<8x128xf32>
    %186 = arith.select %183, %185, %178 : vector<8x128xi1>, vector<8x128xf32>
    %c1_68 = arith.constant 1 : index
    %c9_69 = arith.constant 9 : index
    %187 = memref.load %arg13[%c1_68, %c9_69] : memref<3x22xf32, #tpu.memory_space<smem>>
    %188 = vector.broadcast %187 : f32 to vector<8x128xf32>
    %189 = arith.select %183, %188, %181 : vector<8x128xi1>, vector<8x128xf32>
    %c5_i32 = arith.constant 5 : i32
    %190 = vector.broadcast %c5_i32 : i32 to vector<8x128xi32>
    %191 = arith.cmpi eq, %147, %190 : vector<8x128xi32>
    %c1_70 = arith.constant 1 : index
    %c10_71 = arith.constant 10 : index
    %192 = memref.load %arg13[%c1_70, %c10_71] : memref<3x22xf32, #tpu.memory_space<smem>>
    %193 = vector.broadcast %192 : f32 to vector<8x128xf32>
    %194 = arith.select %191, %193, %186 : vector<8x128xi1>, vector<8x128xf32>
    %c1_72 = arith.constant 1 : index
    %c11_73 = arith.constant 11 : index
    %195 = memref.load %arg13[%c1_72, %c11_73] : memref<3x22xf32, #tpu.memory_space<smem>>
    %196 = vector.broadcast %195 : f32 to vector<8x128xf32>
    %197 = arith.select %191, %196, %189 : vector<8x128xi1>, vector<8x128xf32>
    %c6_i32 = arith.constant 6 : i32
    %198 = vector.broadcast %c6_i32 : i32 to vector<8x128xi32>
    %199 = arith.cmpi eq, %147, %198 : vector<8x128xi32>
    %c1_74 = arith.constant 1 : index
    %c12 = arith.constant 12 : index
    %200 = memref.load %arg13[%c1_74, %c12] : memref<3x22xf32, #tpu.memory_space<smem>>
    %201 = vector.broadcast %200 : f32 to vector<8x128xf32>
    %202 = arith.select %199, %201, %194 : vector<8x128xi1>, vector<8x128xf32>
    %c1_75 = arith.constant 1 : index
    %c13 = arith.constant 13 : index
    %203 = memref.load %arg13[%c1_75, %c13] : memref<3x22xf32, #tpu.memory_space<smem>>
    %204 = vector.broadcast %203 : f32 to vector<8x128xf32>
    %205 = arith.select %199, %204, %197 : vector<8x128xi1>, vector<8x128xf32>
    %206 = vector.extract_strided_slice %101 {offsets = [2, 0, 0], sizes = [1, 8, 128], strides = [1, 1, 1]} : vector<3x8x128xi32> to vector<1x8x128xi32>
    %207 = vector.shape_cast %206 : vector<1x8x128xi32> to vector<8x128xi32>
    %cst_76 = arith.constant 0.000000e+00 : f32
    %208 = vector.broadcast %cst_76 : f32 to vector<8x128xf32>
    %cst_77 = arith.constant 0.000000e+00 : f32
    %209 = vector.broadcast %cst_77 : f32 to vector<8x128xf32>
    %c0_i32_78 = arith.constant 0 : i32
    %210 = vector.broadcast %c0_i32_78 : i32 to vector<8x128xi32>
    %211 = arith.cmpi eq, %207, %210 : vector<8x128xi32>
    %c2_79 = arith.constant 2 : index
    %c0_80 = arith.constant 0 : index
    %212 = memref.load %arg13[%c2_79, %c0_80] : memref<3x22xf32, #tpu.memory_space<smem>>
    %213 = vector.broadcast %212 : f32 to vector<8x128xf32>
    %214 = arith.select %211, %213, %208 : vector<8x128xi1>, vector<8x128xf32>
    %c2_81 = arith.constant 2 : index
    %c1_82 = arith.constant 1 : index
    %215 = memref.load %arg13[%c2_81, %c1_82] : memref<3x22xf32, #tpu.memory_space<smem>>
    %216 = vector.broadcast %215 : f32 to vector<8x128xf32>
    %217 = arith.select %211, %216, %209 : vector<8x128xi1>, vector<8x128xf32>
    %c1_i32_83 = arith.constant 1 : i32
    %218 = vector.broadcast %c1_i32_83 : i32 to vector<8x128xi32>
    %219 = arith.cmpi eq, %207, %218 : vector<8x128xi32>
    %c2_84 = arith.constant 2 : index
    %c2_85 = arith.constant 2 : index
    %220 = memref.load %arg13[%c2_84, %c2_85] : memref<3x22xf32, #tpu.memory_space<smem>>
    %221 = vector.broadcast %220 : f32 to vector<8x128xf32>
    %222 = arith.select %219, %221, %214 : vector<8x128xi1>, vector<8x128xf32>
    %c2_86 = arith.constant 2 : index
    %c3_87 = arith.constant 3 : index
    %223 = memref.load %arg13[%c2_86, %c3_87] : memref<3x22xf32, #tpu.memory_space<smem>>
    %224 = vector.broadcast %223 : f32 to vector<8x128xf32>
    %225 = arith.select %219, %224, %217 : vector<8x128xi1>, vector<8x128xf32>
    %c2_i32_88 = arith.constant 2 : i32
    %226 = vector.broadcast %c2_i32_88 : i32 to vector<8x128xi32>
    %227 = arith.cmpi eq, %207, %226 : vector<8x128xi32>
    %c2_89 = arith.constant 2 : index
    %c4_90 = arith.constant 4 : index
    %228 = memref.load %arg13[%c2_89, %c4_90] : memref<3x22xf32, #tpu.memory_space<smem>>
    %229 = vector.broadcast %228 : f32 to vector<8x128xf32>
    %230 = arith.select %227, %229, %222 : vector<8x128xi1>, vector<8x128xf32>
    %c2_91 = arith.constant 2 : index
    %c5_92 = arith.constant 5 : index
    %231 = memref.load %arg13[%c2_91, %c5_92] : memref<3x22xf32, #tpu.memory_space<smem>>
    %232 = vector.broadcast %231 : f32 to vector<8x128xf32>
    %233 = arith.select %227, %232, %225 : vector<8x128xi1>, vector<8x128xf32>
    %c3_i32_93 = arith.constant 3 : i32
    %234 = vector.broadcast %c3_i32_93 : i32 to vector<8x128xi32>
    %235 = arith.cmpi eq, %207, %234 : vector<8x128xi32>
    %c2_94 = arith.constant 2 : index
    %c6_95 = arith.constant 6 : index
    %236 = memref.load %arg13[%c2_94, %c6_95] : memref<3x22xf32, #tpu.memory_space<smem>>
    %237 = vector.broadcast %236 : f32 to vector<8x128xf32>
    %238 = arith.select %235, %237, %230 : vector<8x128xi1>, vector<8x128xf32>
    %c2_96 = arith.constant 2 : index
    %c7_97 = arith.constant 7 : index
    %239 = memref.load %arg13[%c2_96, %c7_97] : memref<3x22xf32, #tpu.memory_space<smem>>
    %240 = vector.broadcast %239 : f32 to vector<8x128xf32>
    %241 = arith.select %235, %240, %233 : vector<8x128xi1>, vector<8x128xf32>
    %c4_i32_98 = arith.constant 4 : i32
    %242 = vector.broadcast %c4_i32_98 : i32 to vector<8x128xi32>
    %243 = arith.cmpi eq, %207, %242 : vector<8x128xi32>
    %c2_99 = arith.constant 2 : index
    %c8_100 = arith.constant 8 : index
    %244 = memref.load %arg13[%c2_99, %c8_100] : memref<3x22xf32, #tpu.memory_space<smem>>
    %245 = vector.broadcast %244 : f32 to vector<8x128xf32>
    %246 = arith.select %243, %245, %238 : vector<8x128xi1>, vector<8x128xf32>
    %c2_101 = arith.constant 2 : index
    %c9_102 = arith.constant 9 : index
    %247 = memref.load %arg13[%c2_101, %c9_102] : memref<3x22xf32, #tpu.memory_space<smem>>
    %248 = vector.broadcast %247 : f32 to vector<8x128xf32>
    %249 = arith.select %243, %248, %241 : vector<8x128xi1>, vector<8x128xf32>
    %c5_i32_103 = arith.constant 5 : i32
    %250 = vector.broadcast %c5_i32_103 : i32 to vector<8x128xi32>
    %251 = arith.cmpi eq, %207, %250 : vector<8x128xi32>
    %c2_104 = arith.constant 2 : index
    %c10_105 = arith.constant 10 : index
    %252 = memref.load %arg13[%c2_104, %c10_105] : memref<3x22xf32, #tpu.memory_space<smem>>
    %253 = vector.broadcast %252 : f32 to vector<8x128xf32>
    %254 = arith.select %251, %253, %246 : vector<8x128xi1>, vector<8x128xf32>
    %c2_106 = arith.constant 2 : index
    %c11_107 = arith.constant 11 : index
    %255 = memref.load %arg13[%c2_106, %c11_107] : memref<3x22xf32, #tpu.memory_space<smem>>
    %256 = vector.broadcast %255 : f32 to vector<8x128xf32>
    %257 = arith.select %251, %256, %249 : vector<8x128xi1>, vector<8x128xf32>
    %c6_i32_108 = arith.constant 6 : i32
    %258 = vector.broadcast %c6_i32_108 : i32 to vector<8x128xi32>
    %259 = arith.cmpi eq, %207, %258 : vector<8x128xi32>
    %c2_109 = arith.constant 2 : index
    %c12_110 = arith.constant 12 : index
    %260 = memref.load %arg13[%c2_109, %c12_110] : memref<3x22xf32, #tpu.memory_space<smem>>
    %261 = vector.broadcast %260 : f32 to vector<8x128xf32>
    %262 = arith.select %259, %261, %254 : vector<8x128xi1>, vector<8x128xf32>
    %c2_111 = arith.constant 2 : index
    %c13_112 = arith.constant 13 : index
    %263 = memref.load %arg13[%c2_111, %c13_112] : memref<3x22xf32, #tpu.memory_space<smem>>
    %264 = vector.broadcast %263 : f32 to vector<8x128xf32>
    %265 = arith.select %259, %264, %257 : vector<8x128xi1>, vector<8x128xf32>
    %c7_i32 = arith.constant 7 : i32
    %266 = vector.broadcast %c7_i32 : i32 to vector<8x128xi32>
    %267 = arith.cmpi eq, %207, %266 : vector<8x128xi32>
    %c2_113 = arith.constant 2 : index
    %c14 = arith.constant 14 : index
    %268 = memref.load %arg13[%c2_113, %c14] : memref<3x22xf32, #tpu.memory_space<smem>>
    %269 = vector.broadcast %268 : f32 to vector<8x128xf32>
    %270 = arith.select %267, %269, %262 : vector<8x128xi1>, vector<8x128xf32>
    %c2_114 = arith.constant 2 : index
    %c15 = arith.constant 15 : index
    %271 = memref.load %arg13[%c2_114, %c15] : memref<3x22xf32, #tpu.memory_space<smem>>
    %272 = vector.broadcast %271 : f32 to vector<8x128xf32>
    %273 = arith.select %267, %272, %265 : vector<8x128xi1>, vector<8x128xf32>
    %c8_i32 = arith.constant 8 : i32
    %274 = vector.broadcast %c8_i32 : i32 to vector<8x128xi32>
    %275 = arith.cmpi eq, %207, %274 : vector<8x128xi32>
    %c2_115 = arith.constant 2 : index
    %c16 = arith.constant 16 : index
    %276 = memref.load %arg13[%c2_115, %c16] : memref<3x22xf32, #tpu.memory_space<smem>>
    %277 = vector.broadcast %276 : f32 to vector<8x128xf32>
    %278 = arith.select %275, %277, %270 : vector<8x128xi1>, vector<8x128xf32>
    %c2_116 = arith.constant 2 : index
    %c17 = arith.constant 17 : index
    %279 = memref.load %arg13[%c2_116, %c17] : memref<3x22xf32, #tpu.memory_space<smem>>
    %280 = vector.broadcast %279 : f32 to vector<8x128xf32>
    %281 = arith.select %275, %280, %273 : vector<8x128xi1>, vector<8x128xf32>
    %c9_i32 = arith.constant 9 : i32
    %282 = vector.broadcast %c9_i32 : i32 to vector<8x128xi32>
    %283 = arith.cmpi eq, %207, %282 : vector<8x128xi32>
    %c2_117 = arith.constant 2 : index
    %c18 = arith.constant 18 : index
    %284 = memref.load %arg13[%c2_117, %c18] : memref<3x22xf32, #tpu.memory_space<smem>>
    %285 = vector.broadcast %284 : f32 to vector<8x128xf32>
    %286 = arith.select %283, %285, %278 : vector<8x128xi1>, vector<8x128xf32>
    %c2_118 = arith.constant 2 : index
    %c19 = arith.constant 19 : index
    %287 = memref.load %arg13[%c2_118, %c19] : memref<3x22xf32, #tpu.memory_space<smem>>
    %288 = vector.broadcast %287 : f32 to vector<8x128xf32>
    %289 = arith.select %283, %288, %281 : vector<8x128xi1>, vector<8x128xf32>
    %c10_i32 = arith.constant 10 : i32
    %290 = vector.broadcast %c10_i32 : i32 to vector<8x128xi32>
    %291 = arith.cmpi eq, %207, %290 : vector<8x128xi32>
    %c2_119 = arith.constant 2 : index
    %c20 = arith.constant 20 : index
    %292 = memref.load %arg13[%c2_119, %c20] : memref<3x22xf32, #tpu.memory_space<smem>>
    %293 = vector.broadcast %292 : f32 to vector<8x128xf32>
    %294 = arith.select %291, %293, %286 : vector<8x128xi1>, vector<8x128xf32>
    %c2_120 = arith.constant 2 : index
    %c21 = arith.constant 21 : index
    %295 = memref.load %arg13[%c2_120, %c21] : memref<3x22xf32, #tpu.memory_space<smem>>
    %296 = vector.broadcast %295 : f32 to vector<8x128xf32>
    %297 = arith.select %291, %296, %289 : vector<8x128xi1>, vector<8x128xf32>
    %c0_121 = arith.constant 0 : index
    %298 = memref.load %arg7[%c0_121] : memref<32xf32, #tpu.memory_space<smem>>
    %299 = vector.broadcast %298 : f32 to vector<8x128xf32>
    %300 = arith.mulf %84, %299 : vector<8x128xf32>
    %c0_122 = arith.constant 0 : index
    %301 = memref.load %arg8[%c0_122] : memref<4xf32, #tpu.memory_space<smem>>
    %302 = vector.broadcast %301 : f32 to vector<8x128xf32>
    %303 = arith.addf %300, %302 : vector<8x128xf32>
    %c4_123 = arith.constant 4 : index
    %304 = memref.load %arg7[%c4_123] : memref<32xf32, #tpu.memory_space<smem>>
    %305 = vector.broadcast %304 : f32 to vector<8x128xf32>
    %306 = arith.mulf %100, %305 : vector<8x128xf32>
    %307 = arith.addf %303, %306 : vector<8x128xf32>
    %c8_124 = arith.constant 8 : index
    %308 = memref.load %arg7[%c8_124] : memref<32xf32, #tpu.memory_space<smem>>
    %309 = vector.broadcast %308 : f32 to vector<8x128xf32>
    %310 = arith.mulf %142, %309 : vector<8x128xf32>
    %311 = arith.addf %307, %310 : vector<8x128xf32>
    %c12_125 = arith.constant 12 : index
    %312 = memref.load %arg7[%c12_125] : memref<32xf32, #tpu.memory_space<smem>>
    %313 = vector.broadcast %312 : f32 to vector<8x128xf32>
    %314 = arith.mulf %145, %313 : vector<8x128xf32>
    %315 = arith.addf %311, %314 : vector<8x128xf32>
    %c16_126 = arith.constant 16 : index
    %316 = memref.load %arg7[%c16_126] : memref<32xf32, #tpu.memory_space<smem>>
    %317 = vector.broadcast %316 : f32 to vector<8x128xf32>
    %318 = arith.mulf %202, %317 : vector<8x128xf32>
    %319 = arith.addf %315, %318 : vector<8x128xf32>
    %c20_127 = arith.constant 20 : index
    %320 = memref.load %arg7[%c20_127] : memref<32xf32, #tpu.memory_space<smem>>
    %321 = vector.broadcast %320 : f32 to vector<8x128xf32>
    %322 = arith.mulf %205, %321 : vector<8x128xf32>
    %323 = arith.addf %319, %322 : vector<8x128xf32>
    %c24 = arith.constant 24 : index
    %324 = memref.load %arg7[%c24] : memref<32xf32, #tpu.memory_space<smem>>
    %325 = vector.broadcast %324 : f32 to vector<8x128xf32>
    %326 = arith.mulf %294, %325 : vector<8x128xf32>
    %327 = arith.addf %323, %326 : vector<8x128xf32>
    %c28 = arith.constant 28 : index
    %328 = memref.load %arg7[%c28] : memref<32xf32, #tpu.memory_space<smem>>
    %329 = vector.broadcast %328 : f32 to vector<8x128xf32>
    %330 = arith.mulf %297, %329 : vector<8x128xf32>
    %331 = arith.addf %327, %330 : vector<8x128xf32>
    %cst_128 = arith.constant 0.000000e+00 : f32
    %332 = vector.broadcast %cst_128 : f32 to vector<8x128xf32>
    %333 = arith.maximumf %331, %332 : vector<8x128xf32>
    %c1_129 = arith.constant 1 : index
    %334 = memref.load %arg7[%c1_129] : memref<32xf32, #tpu.memory_space<smem>>
    %335 = vector.broadcast %334 : f32 to vector<8x128xf32>
    %336 = arith.mulf %84, %335 : vector<8x128xf32>
    %c1_130 = arith.constant 1 : index
    %337 = memref.load %arg8[%c1_130] : memref<4xf32, #tpu.memory_space<smem>>
    %338 = vector.broadcast %337 : f32 to vector<8x128xf32>
    %339 = arith.addf %336, %338 : vector<8x128xf32>
    %c5_131 = arith.constant 5 : index
    %340 = memref.load %arg7[%c5_131] : memref<32xf32, #tpu.memory_space<smem>>
    %341 = vector.broadcast %340 : f32 to vector<8x128xf32>
    %342 = arith.mulf %100, %341 : vector<8x128xf32>
    %343 = arith.addf %339, %342 : vector<8x128xf32>
    %c9_132 = arith.constant 9 : index
    %344 = memref.load %arg7[%c9_132] : memref<32xf32, #tpu.memory_space<smem>>
    %345 = vector.broadcast %344 : f32 to vector<8x128xf32>
    %346 = arith.mulf %142, %345 : vector<8x128xf32>
    %347 = arith.addf %343, %346 : vector<8x128xf32>
    %c13_133 = arith.constant 13 : index
    %348 = memref.load %arg7[%c13_133] : memref<32xf32, #tpu.memory_space<smem>>
    %349 = vector.broadcast %348 : f32 to vector<8x128xf32>
    %350 = arith.mulf %145, %349 : vector<8x128xf32>
    %351 = arith.addf %347, %350 : vector<8x128xf32>
    %c17_134 = arith.constant 17 : index
    %352 = memref.load %arg7[%c17_134] : memref<32xf32, #tpu.memory_space<smem>>
    %353 = vector.broadcast %352 : f32 to vector<8x128xf32>
    %354 = arith.mulf %202, %353 : vector<8x128xf32>
    %355 = arith.addf %351, %354 : vector<8x128xf32>
    %c21_135 = arith.constant 21 : index
    %356 = memref.load %arg7[%c21_135] : memref<32xf32, #tpu.memory_space<smem>>
    %357 = vector.broadcast %356 : f32 to vector<8x128xf32>
    %358 = arith.mulf %205, %357 : vector<8x128xf32>
    %359 = arith.addf %355, %358 : vector<8x128xf32>
    %c25 = arith.constant 25 : index
    %360 = memref.load %arg7[%c25] : memref<32xf32, #tpu.memory_space<smem>>
    %361 = vector.broadcast %360 : f32 to vector<8x128xf32>
    %362 = arith.mulf %294, %361 : vector<8x128xf32>
    %363 = arith.addf %359, %362 : vector<8x128xf32>
    %c29 = arith.constant 29 : index
    %364 = memref.load %arg7[%c29] : memref<32xf32, #tpu.memory_space<smem>>
    %365 = vector.broadcast %364 : f32 to vector<8x128xf32>
    %366 = arith.mulf %297, %365 : vector<8x128xf32>
    %367 = arith.addf %363, %366 : vector<8x128xf32>
    %cst_136 = arith.constant 0.000000e+00 : f32
    %368 = vector.broadcast %cst_136 : f32 to vector<8x128xf32>
    %369 = arith.maximumf %367, %368 : vector<8x128xf32>
    %c2_137 = arith.constant 2 : index
    %370 = memref.load %arg7[%c2_137] : memref<32xf32, #tpu.memory_space<smem>>
    %371 = vector.broadcast %370 : f32 to vector<8x128xf32>
    %372 = arith.mulf %84, %371 : vector<8x128xf32>
    %c2_138 = arith.constant 2 : index
    %373 = memref.load %arg8[%c2_138] : memref<4xf32, #tpu.memory_space<smem>>
    %374 = vector.broadcast %373 : f32 to vector<8x128xf32>
    %375 = arith.addf %372, %374 : vector<8x128xf32>
    %c6_139 = arith.constant 6 : index
    %376 = memref.load %arg7[%c6_139] : memref<32xf32, #tpu.memory_space<smem>>
    %377 = vector.broadcast %376 : f32 to vector<8x128xf32>
    %378 = arith.mulf %100, %377 : vector<8x128xf32>
    %379 = arith.addf %375, %378 : vector<8x128xf32>
    %c10_140 = arith.constant 10 : index
    %380 = memref.load %arg7[%c10_140] : memref<32xf32, #tpu.memory_space<smem>>
    %381 = vector.broadcast %380 : f32 to vector<8x128xf32>
    %382 = arith.mulf %142, %381 : vector<8x128xf32>
    %383 = arith.addf %379, %382 : vector<8x128xf32>
    %c14_141 = arith.constant 14 : index
    %384 = memref.load %arg7[%c14_141] : memref<32xf32, #tpu.memory_space<smem>>
    %385 = vector.broadcast %384 : f32 to vector<8x128xf32>
    %386 = arith.mulf %145, %385 : vector<8x128xf32>
    %387 = arith.addf %383, %386 : vector<8x128xf32>
    %c18_142 = arith.constant 18 : index
    %388 = memref.load %arg7[%c18_142] : memref<32xf32, #tpu.memory_space<smem>>
    %389 = vector.broadcast %388 : f32 to vector<8x128xf32>
    %390 = arith.mulf %202, %389 : vector<8x128xf32>
    %391 = arith.addf %387, %390 : vector<8x128xf32>
    %c22 = arith.constant 22 : index
    %392 = memref.load %arg7[%c22] : memref<32xf32, #tpu.memory_space<smem>>
    %393 = vector.broadcast %392 : f32 to vector<8x128xf32>
    %394 = arith.mulf %205, %393 : vector<8x128xf32>
    %395 = arith.addf %391, %394 : vector<8x128xf32>
    %c26 = arith.constant 26 : index
    %396 = memref.load %arg7[%c26] : memref<32xf32, #tpu.memory_space<smem>>
    %397 = vector.broadcast %396 : f32 to vector<8x128xf32>
    %398 = arith.mulf %294, %397 : vector<8x128xf32>
    %399 = arith.addf %395, %398 : vector<8x128xf32>
    %c30 = arith.constant 30 : index
    %400 = memref.load %arg7[%c30] : memref<32xf32, #tpu.memory_space<smem>>
    %401 = vector.broadcast %400 : f32 to vector<8x128xf32>
    %402 = arith.mulf %297, %401 : vector<8x128xf32>
    %403 = arith.addf %399, %402 : vector<8x128xf32>
    %cst_143 = arith.constant 0.000000e+00 : f32
    %404 = vector.broadcast %cst_143 : f32 to vector<8x128xf32>
    %405 = arith.maximumf %403, %404 : vector<8x128xf32>
    %c3_144 = arith.constant 3 : index
    %406 = memref.load %arg7[%c3_144] : memref<32xf32, #tpu.memory_space<smem>>
    %407 = vector.broadcast %406 : f32 to vector<8x128xf32>
    %408 = arith.mulf %84, %407 : vector<8x128xf32>
    %c3_145 = arith.constant 3 : index
    %409 = memref.load %arg8[%c3_145] : memref<4xf32, #tpu.memory_space<smem>>
    %410 = vector.broadcast %409 : f32 to vector<8x128xf32>
    %411 = arith.addf %408, %410 : vector<8x128xf32>
    %c7_146 = arith.constant 7 : index
    %412 = memref.load %arg7[%c7_146] : memref<32xf32, #tpu.memory_space<smem>>
    %413 = vector.broadcast %412 : f32 to vector<8x128xf32>
    %414 = arith.mulf %100, %413 : vector<8x128xf32>
    %415 = arith.addf %411, %414 : vector<8x128xf32>
    %c11_147 = arith.constant 11 : index
    %416 = memref.load %arg7[%c11_147] : memref<32xf32, #tpu.memory_space<smem>>
    %417 = vector.broadcast %416 : f32 to vector<8x128xf32>
    %418 = arith.mulf %142, %417 : vector<8x128xf32>
    %419 = arith.addf %415, %418 : vector<8x128xf32>
    %c15_148 = arith.constant 15 : index
    %420 = memref.load %arg7[%c15_148] : memref<32xf32, #tpu.memory_space<smem>>
    %421 = vector.broadcast %420 : f32 to vector<8x128xf32>
    %422 = arith.mulf %145, %421 : vector<8x128xf32>
    %423 = arith.addf %419, %422 : vector<8x128xf32>
    %c19_149 = arith.constant 19 : index
    %424 = memref.load %arg7[%c19_149] : memref<32xf32, #tpu.memory_space<smem>>
    %425 = vector.broadcast %424 : f32 to vector<8x128xf32>
    %426 = arith.mulf %202, %425 : vector<8x128xf32>
    %427 = arith.addf %423, %426 : vector<8x128xf32>
    %c23 = arith.constant 23 : index
    %428 = memref.load %arg7[%c23] : memref<32xf32, #tpu.memory_space<smem>>
    %429 = vector.broadcast %428 : f32 to vector<8x128xf32>
    %430 = arith.mulf %205, %429 : vector<8x128xf32>
    %431 = arith.addf %427, %430 : vector<8x128xf32>
    %c27 = arith.constant 27 : index
    %432 = memref.load %arg7[%c27] : memref<32xf32, #tpu.memory_space<smem>>
    %433 = vector.broadcast %432 : f32 to vector<8x128xf32>
    %434 = arith.mulf %294, %433 : vector<8x128xf32>
    %435 = arith.addf %431, %434 : vector<8x128xf32>
    %c31 = arith.constant 31 : index
    %436 = memref.load %arg7[%c31] : memref<32xf32, #tpu.memory_space<smem>>
    %437 = vector.broadcast %436 : f32 to vector<8x128xf32>
    %438 = arith.mulf %297, %437 : vector<8x128xf32>
    %439 = arith.addf %435, %438 : vector<8x128xf32>
    %cst_150 = arith.constant 0.000000e+00 : f32
    %440 = vector.broadcast %cst_150 : f32 to vector<8x128xf32>
    %441 = arith.maximumf %439, %440 : vector<8x128xf32>
    %c0_151 = arith.constant 0 : index
    %442 = memref.load %arg9[%c0_151] : memref<8xf32, #tpu.memory_space<smem>>
    %443 = vector.broadcast %442 : f32 to vector<8x128xf32>
    %444 = arith.mulf %333, %443 : vector<8x128xf32>
    %c0_152 = arith.constant 0 : index
    %445 = memref.load %arg10[%c0_152] : memref<2xf32, #tpu.memory_space<smem>>
    %446 = vector.broadcast %445 : f32 to vector<8x128xf32>
    %447 = arith.addf %444, %446 : vector<8x128xf32>
    %c2_153 = arith.constant 2 : index
    %448 = memref.load %arg9[%c2_153] : memref<8xf32, #tpu.memory_space<smem>>
    %449 = vector.broadcast %448 : f32 to vector<8x128xf32>
    %450 = arith.mulf %369, %449 : vector<8x128xf32>
    %451 = arith.addf %447, %450 : vector<8x128xf32>
    %c4_154 = arith.constant 4 : index
    %452 = memref.load %arg9[%c4_154] : memref<8xf32, #tpu.memory_space<smem>>
    %453 = vector.broadcast %452 : f32 to vector<8x128xf32>
    %454 = arith.mulf %405, %453 : vector<8x128xf32>
    %455 = arith.addf %451, %454 : vector<8x128xf32>
    %c6_155 = arith.constant 6 : index
    %456 = memref.load %arg9[%c6_155] : memref<8xf32, #tpu.memory_space<smem>>
    %457 = vector.broadcast %456 : f32 to vector<8x128xf32>
    %458 = arith.mulf %441, %457 : vector<8x128xf32>
    %459 = arith.addf %455, %458 : vector<8x128xf32>
    %cst_156 = arith.constant 0.000000e+00 : f32
    %460 = vector.broadcast %cst_156 : f32 to vector<8x128xf32>
    %461 = arith.maximumf %459, %460 : vector<8x128xf32>
    %c1_157 = arith.constant 1 : index
    %462 = memref.load %arg9[%c1_157] : memref<8xf32, #tpu.memory_space<smem>>
    %463 = vector.broadcast %462 : f32 to vector<8x128xf32>
    %464 = arith.mulf %333, %463 : vector<8x128xf32>
    %c1_158 = arith.constant 1 : index
    %465 = memref.load %arg10[%c1_158] : memref<2xf32, #tpu.memory_space<smem>>
    %466 = vector.broadcast %465 : f32 to vector<8x128xf32>
    %467 = arith.addf %464, %466 : vector<8x128xf32>
    %c3_159 = arith.constant 3 : index
    %468 = memref.load %arg9[%c3_159] : memref<8xf32, #tpu.memory_space<smem>>
    %469 = vector.broadcast %468 : f32 to vector<8x128xf32>
    %470 = arith.mulf %369, %469 : vector<8x128xf32>
    %471 = arith.addf %467, %470 : vector<8x128xf32>
    %c5_160 = arith.constant 5 : index
    %472 = memref.load %arg9[%c5_160] : memref<8xf32, #tpu.memory_space<smem>>
    %473 = vector.broadcast %472 : f32 to vector<8x128xf32>
    %474 = arith.mulf %405, %473 : vector<8x128xf32>
    %475 = arith.addf %471, %474 : vector<8x128xf32>
    %c7_161 = arith.constant 7 : index
    %476 = memref.load %arg9[%c7_161] : memref<8xf32, #tpu.memory_space<smem>>
    %477 = vector.broadcast %476 : f32 to vector<8x128xf32>
    %478 = arith.mulf %441, %477 : vector<8x128xf32>
    %479 = arith.addf %475, %478 : vector<8x128xf32>
    %cst_162 = arith.constant 0.000000e+00 : f32
    %480 = vector.broadcast %cst_162 : f32 to vector<8x128xf32>
    %481 = arith.maximumf %479, %480 : vector<8x128xf32>
    %c0_163 = arith.constant 0 : index
    %482 = memref.load %arg11[%c0_163] : memref<2xf32, #tpu.memory_space<smem>>
    %483 = vector.broadcast %482 : f32 to vector<8x128xf32>
    %484 = arith.mulf %461, %483 : vector<8x128xf32>
    %c0_164 = arith.constant 0 : index
    %485 = memref.load %arg12[%c0_164] : memref<1xf32, #tpu.memory_space<smem>>
    %486 = vector.broadcast %485 : f32 to vector<8x128xf32>
    %487 = arith.addf %484, %486 : vector<8x128xf32>
    %c1_165 = arith.constant 1 : index
    %488 = memref.load %arg11[%c1_165] : memref<2xf32, #tpu.memory_space<smem>>
    %489 = vector.broadcast %488 : f32 to vector<8x128xf32>
    %490 = arith.mulf %481, %489 : vector<8x128xf32>
    %491 = arith.addf %487, %490 : vector<8x128xf32>
    %492 = arith.negf %491 : vector<8x128xf32>
    %493 = math.exp %492 : vector<8x128xf32>
    %cst_166 = arith.constant 1.000000e+00 : f32
    %494 = vector.broadcast %cst_166 : f32 to vector<8x128xf32>
    %495 = arith.addf %494, %493 : vector<8x128xf32>
    %496 = arith.divf %494, %495 : vector<8x128xf32>
    %c0_167 = arith.constant 0 : index
    %c0_168 = arith.constant 0 : index
    %497 = vector.load %arg14[%c0_167, %c0_168] : memref<8x128xf32, #tpu.memory_space<vmem>>, vector<8x128xf32>
    tpu.vector_store %arg14[%c0_167, %c0_168], %496 {strides = array<i32>} : memref<8x128xf32, #tpu.memory_space<vmem>>, vector<8x128xf32>,
    return
  }
  func.func @transform_0(%arg0: i32) -> (i32, i32, i32) {
    %c0_i32 = arith.constant 0 : i32
    %c0_i32_0 = arith.constant 0 : i32
    %c0_i32_1 = arith.constant 0 : i32
    return %c0_i32, %arg0, %c0_i32_0 : i32, i32, i32
  }
  func.func @transform_1(%arg0: i32) -> (i32, i32, i32) {
    %c0_i32 = arith.constant 0 : i32
    %c0_i32_0 = arith.constant 0 : i32
    %c0_i32_1 = arith.constant 0 : i32
    return %c0_i32, %arg0, %c0_i32_0 : i32, i32, i32
  }
  func.func @transform_2(%arg0: i32) -> i32 {
    %c0_i32 = arith.constant 0 : i32
    %c0_i32_0 = arith.constant 0 : i32
    return %c0_i32 : i32
  }
  func.func @transform_3(%arg0: i32) -> i32 {
    %c0_i32 = arith.constant 0 : i32
    %c0_i32_0 = arith.constant 0 : i32
    return %c0_i32 : i32
  }
  func.func @transform_4(%arg0: i32) -> i32 {
    %c0_i32 = arith.constant 0 : i32
    %c0_i32_0 = arith.constant 0 : i32
    return %c0_i32 : i32
  }
  func.func @transform_5(%arg0: i32) -> i32 {
    %c0_i32 = arith.constant 0 : i32
    %c0_i32_0 = arith.constant 0 : i32
    return %c0_i32 : i32
  }
  func.func @transform_6(%arg0: i32) -> i32 {
    %c0_i32 = arith.constant 0 : i32
    %c0_i32_0 = arith.constant 0 : i32
    return %c0_i32 : i32
  }
  func.func @transform_7(%arg0: i32) -> i32 {
    %c0_i32 = arith.constant 0 : i32
    %c0_i32_0 = arith.constant 0 : i32
    return %c0_i32 : i32
  }
  func.func @transform_8(%arg0: i32) -> i32 {
    %c0_i32 = arith.constant 0 : i32
    %c0_i32_0 = arith.constant 0 : i32
    return %c0_i32 : i32
  }
  func.func @transform_9(%arg0: i32) -> i32 {
    %c0_i32 = arith.constant 0 : i32
    %c0_i32_0 = arith.constant 0 : i32
    return %c0_i32 : i32
  }
  func.func @transform_10(%arg0: i32) -> i32 {
    %c0_i32 = arith.constant 0 : i32
    %c0_i32_0 = arith.constant 0 : i32
    return %c0_i32 : i32
  }
  func.func @transform_11(%arg0: i32) -> i32 {
    %c0_i32 = arith.constant 0 : i32
    %c0_i32_0 = arith.constant 0 : i32
    return %c0_i32 : i32
  }
  func.func @transform_12(%arg0: i32) -> (i32, i32) {
    %c0_i32 = arith.constant 0 : i32
    %c0_i32_0 = arith.constant 0 : i32
    %c0_i32_1 = arith.constant 0 : i32
    return %c0_i32, %c0_i32_0 : i32, i32
  }
  func.func @transform_13(%arg0: i32) -> (i32, i32) {
    %c0_i32 = arith.constant 0 : i32
    %c0_i32_0 = arith.constant 0 : i32
    return %arg0, %c0_i32 : i32, i32
  }
}

</mosaic_0001>

<llo_original>
// kernel: tpu_custom_call.1
$region0: #{tpu_custom_call.1}
  #allocation0 [shape = 'u32[]', space=smem, size = 0x4, offset = 0x4, fixed_abs, tag = 'smem constant byte address 0x4 - core index']
  #allocation1 [shape = 'u32[144,128]{1,0:T(1,128)}', space=vmem, size = 0x12000, scoped, tag = 'internal scratch']
  #allocation2 [shape = 'f32[1]{0:T(128)S(6)}', space=smem, size = 0x200, scoped, tag = 'scoped memory for tpu_custom_call.1']
  %s0 = inlined_call_operand.hbm [shape: f32[4,8,128], index: 0, kind: input, shape index: {}]
  %s1 = inlined_call_operand.hbm [shape: s32[3,8,128], index: 1, kind: input, shape index: {}]
  %s2 = inlined_call_operand.vmem [shape: f32[12], index: 2, kind: input, shape index: {}]
  %s3 = inlined_call_operand.vmem [shape: f32[3], index: 3, kind: input, shape index: {}]
  %s4 = inlined_call_operand.vmem [shape: f32[6], index: 4, kind: input, shape index: {}]
  %s5 = inlined_call_operand.vmem [shape: f32[2], index: 5, kind: input, shape index: {}]
  %s6 = inlined_call_operand.vmem [shape: f32[32], index: 6, kind: input, shape index: {}]
  %s7 = inlined_call_operand.vmem [shape: f32[4], index: 7, kind: input, shape index: {}]
  %s8 = inlined_call_operand.vmem [shape: f32[8], index: 8, kind: input, shape index: {}]
  %s9 = inlined_call_operand.vmem [shape: f32[2], index: 9, kind: input, shape index: {}]
  %s10 = inlined_call_operand.vmem [shape: f32[2], index: 10, kind: input, shape index: {}]
  %s11 = inlined_call_operand.<no memory space> [shape: f32[1], index: 11, kind: input, shape index: {}]
  %s12 = inlined_call_operand.vmem [shape: f32[3,22], index: 12, kind: input, shape index: {}]
  %s13 = inlined_call_operand.hbm [shape: f32[8,128], index: 13, kind: output, shape index: {}]
  %s14 = sld [smem:[#allocation0]]
  $region110: #{tpu_custom_call.1} parent=0
    _
  %s16 = ssub.s32 1, %s14
  %s17 = scalar_select 0, %s16, %s14
  %18 = sst [smem:[#allocation2]] %s11
  $region1: #{tpu_custom_call.1} parent=0
    #allocation3 [shape = 'u8[16384]{0}', space=vmem, size = 0x4000, scoped, tag = 'input window, operand 0, single buffered']
    #allocation4 [shape = 's32[1]{0}', space=sflag, size = 0x4, scoped, tag = 'scoped memory for tpu_custom_call.1']
    #allocation5 [shape = 's32[1]{0}', space=sflag, size = 0x4, scoped, tag = 'scoped memory for tpu_custom_call.1']
    #allocation6 [shape = 's32[1]{0}', space=sflag, size = 0x4, scoped, tag = 'scoped memory for tpu_custom_call.1']
    #allocation7 [shape = 'u8[12288]{0}', space=vmem, size = 0x3000, scoped, tag = 'input window, operand 1, single buffered']
    #allocation8 [shape = 's32[1]{0}', space=sflag, size = 0x4, scoped, tag = 'scoped memory for tpu_custom_call.1']
    #allocation9 [shape = 'u8[512]{0}', space=smem, size = 0x200, scoped, tag = 'input window, operand 2, single buffered']
    #allocation10 [shape = 'u8[512]{0}', space=smem, size = 0x200, scoped, tag = 'input window, operand 3, single buffered']
    #allocation11 [shape = 's32[1]{0}', space=sflag, size = 0x4, scoped, tag = 'scoped memory for tpu_custom_call.1']
    #allocation12 [shape = 'u8[512]{0}', space=smem, size = 0x200, scoped, tag = 'input window, operand 4, single buffered']
    #allocation13 [shape = 'u8[512]{0}', space=smem, size = 0x200, scoped, tag = 'input window, operand 5, single buffered']
    #allocation14 [shape = 's32[1]{0}', space=sflag, size = 0x4, scoped, tag = 'scoped memory for tpu_custom_call.1']
    #allocation15 [shape = 'u8[512]{0}', space=smem, size = 0x200, scoped, tag = 'input window, operand 6, single buffered']
    #allocation16 [shape = 'u8[512]{0}', space=smem, size = 0x200, scoped, tag = 'input window, operand 7, single buffered']
    #allocation17 [shape = 's32[1]{0}', space=sflag, size = 0x4, scoped, tag = 'scoped memory for tpu_custom_call.1']
    #allocation18 [shape = 'u8[512]{0}', space=smem, size = 0x200, scoped, tag = 'input window, operand 8, single buffered']
    #allocation19 [shape = 'u8[512]{0}', space=smem, size = 0x200, scoped, tag = 'input window, operand 9, single buffered']
    #allocation20 [shape = 's32[1]{0}', space=sflag, size = 0x4, scoped, tag = 'scoped memory for tpu_custom_call.1']
    #allocation21 [shape = 'u8[512]{0}', space=smem, size = 0x200, scoped, tag = 'input window, operand 10, single buffered']
    #allocation22 [shape = 'u8[2048]{0}', space=smem, size = 0x800, scoped, tag = 'input window, operand 12, single buffered']
    #allocation23 [shape = 's32[1]{0}', space=sflag, size = 0x4, scoped, tag = 'scoped memory for tpu_custom_call.1']
    #allocation24 [shape = 'u8[4096]{0}', space=vmem, size = 0x1000, scoped, tag = 'output window, operand 0, single buffered']
    %19 = vsyncpa [#allocation4], 0
    %20 = vsyncpa [#allocation8], 0
    %21 = vsyncpa [#allocation6], 0
    %22 = vsyncpa [#allocation11], 0
    %23 = vsyncpa [#allocation14], 0
    %24 = vsyncpa [#allocation17], 0
    %25 = vsyncpa [#allocation20], 0
    %26 = vsyncpa [#allocation23], 0
    %27 = vsyncpa [#allocation5], 0
    // Predicated region
    $region2: #{tpu_custom_call.1} parent=1 // pred_check
      _
    $region3: #{tpu_custom_call.1} parent=1 // pred_check_branch
      %29 = sbr.rel (0) target = $region5
    $region4: #{tpu_custom_call.1} parent=1 // pred_region
      %s31 = ssub.s32 512, 512
      %32 = vsyncadd [#allocation4], %s31
      %s33 = sshll.u32 [#allocation3], 4
      %s34 = int_to_ptr.vmem [resolvable:$true] %s33
      %39 = dma.hbm_to_vmem [thread:$0]  %s0, 512, %s34, [#allocation4], 128, 128, 8
    $region5: #{tpu_custom_call.1} parent=1 // pred_fallthru
      _
    // Predicated region
    $region6: #{tpu_custom_call.1} parent=1 // pred_check
      _
    $region7: #{tpu_custom_call.1} parent=1 // pred_check_branch
      %41 = sbr.rel (0) target = $region9
    $region8: #{tpu_custom_call.1} parent=1 // pred_region
      %s43 = ssub.s32 384, 384
      %44 = vsyncadd [#allocation8], %s43
      %s45 = sshll.u32 [#allocation7], 4
      %s46 = int_to_ptr.vmem [resolvable:$true] %s45
      %51 = dma.hbm_to_vmem [thread:$0]  %s1, 384, %s46, [#allocation8], 128, 128, 8
    $region9: #{tpu_custom_call.1} parent=1 // pred_fallthru
      _
    // Predicated region
    $region10: #{tpu_custom_call.1} parent=1 // pred_check
      _
    $region11: #{tpu_custom_call.1} parent=1 // pred_check_branch
      %53 = sbr.rel (0) target = $region13
    $region12: #{tpu_custom_call.1} parent=1 // pred_region
      %s55 = ssub.s32 16, 16
      %56 = vsyncadd [#allocation6], %s55
      %s58 = sshll.u32 %s2, 4
      %s59 = int_to_ptr.vmem [resolvable:$true] %s58
      %61 = dma.vmem_to_smem %s59, 16, [#allocation9], [#allocation6]
    $region13: #{tpu_custom_call.1} parent=1 // pred_fallthru
      _
    // Predicated region
    $region14: #{tpu_custom_call.1} parent=1 // pred_check
      _
    $region15: #{tpu_custom_call.1} parent=1 // pred_check_branch
      %63 = sbr.rel (0) target = $region17
    $region16: #{tpu_custom_call.1} parent=1 // pred_region
      %s65 = ssub.s32 16, 16
      %66 = vsyncadd [#allocation11], %s65
      %s68 = sshll.u32 %s3, 4
      %s69 = int_to_ptr.vmem [resolvable:$true] %s68
      %71 = dma.vmem_to_smem %s69, 16, [#allocation10], [#allocation11]
    $region17: #{tpu_custom_call.1} parent=1 // pred_fallthru
      _
    // Predicated region
    $region18: #{tpu_custom_call.1} parent=1 // pred_check
      _
    $region19: #{tpu_custom_call.1} parent=1 // pred_check_branch
      %73 = sbr.rel (0) target = $region21
    $region20: #{tpu_custom_call.1} parent=1 // pred_region
      %s75 = ssub.s32 16, 16
      %76 = vsyncadd [#allocation11], %s75
      %s78 = sshll.u32 %s4, 4
      %s79 = int_to_ptr.vmem [resolvable:$true] %s78
      %81 = dma.vmem_to_smem %s79, 16, [#allocation12], [#allocation11]
    $region21: #{tpu_custom_call.1} parent=1 // pred_fallthru
      _
    // Predicated region
    $region22: #{tpu_custom_call.1} parent=1 // pred_check
      _
    $region23: #{tpu_custom_call.1} parent=1 // pred_check_branch
      %83 = sbr.rel (0) target = $region25
    $region24: #{tpu_custom_call.1} parent=1 // pred_region
      %s85 = ssub.s32 16, 16
      %86 = vsyncadd [#allocation14], %s85
      %s88 = sshll.u32 %s5, 4
      %s89 = int_to_ptr.vmem [resolvable:$true] %s88
      %91 = dma.vmem_to_smem %s89, 16, [#allocation13], [#allocation14]
    $region25: #{tpu_custom_call.1} parent=1 // pred_fallthru
      _
    // Predicated region
    $region26: #{tpu_custom_call.1} parent=1 // pred_check
      _
    $region27: #{tpu_custom_call.1} parent=1 // pred_check_branch
      %93 = sbr.rel (0) target = $region29
    $region28: #{tpu_custom_call.1} parent=1 // pred_region
      %s95 = ssub.s32 16, 16
      %96 = vsyncadd [#allocation14], %s95
      %s98 = sshll.u32 %s6, 4
      %s99 = int_to_ptr.vmem [resolvable:$true] %s98
      %101 = dma.vmem_to_smem %s99, 16, [#allocation15], [#allocation14]
    $region29: #{tpu_custom_call.1} parent=1 // pred_fallthru
      _
    // Predicated region
    $region30: #{tpu_custom_call.1} parent=1 // pred_check
      _
    $region31: #{tpu_custom_call.1} parent=1 // pred_check_branch
      %103 = sbr.rel (0) target = $region33
    $region32: #{tpu_custom_call.1} parent=1 // pred_region
      %s105 = ssub.s32 16, 16
      %106 = vsyncadd [#allocation17], %s105
      %s108 = sshll.u32 %s7, 4
      %s109 = int_to_ptr.vmem [resolvable:$true] %s108
      %111 = dma.vmem_to_smem %s109, 16, [#allocation16], [#allocation17]
    $region33: #{tpu_custom_call.1} parent=1 // pred_fallthru
      _
    // Predicated region
    $region34: #{tpu_custom_call.1} parent=1 // pred_check
      _
    $region35: #{tpu_custom_call.1} parent=1 // pred_check_branch
      %113 = sbr.rel (0) target = $region37
    $region36: #{tpu_custom_call.1} parent=1 // pred_region
      %s115 = ssub.s32 16, 16
      %116 = vsyncadd [#allocation17], %s115
      %s118 = sshll.u32 %s8, 4
      %s119 = int_to_ptr.vmem [resolvable:$true] %s118
      %121 = dma.vmem_to_smem %s119, 16, [#allocation18], [#allocation17]
    $region37: #{tpu_custom_call.1} parent=1 // pred_fallthru
      _
    // Predicated region
    $region38: #{tpu_custom_call.1} parent=1 // pred_check
      _
    $region39: #{tpu_custom_call.1} parent=1 // pred_check_branch
      %123 = sbr.rel (0) target = $region41
    $region40: #{tpu_custom_call.1} parent=1 // pred_region
      %s125 = ssub.s32 16, 16
      %126 = vsyncadd [#allocation20], %s125
      %s128 = sshll.u32 %s9, 4
      %s129 = int_to_ptr.vmem [resolvable:$true] %s128
      %131 = dma.vmem_to_smem %s129, 16, [#allocation19], [#allocation20]
    $region41: #{tpu_custom_call.1} parent=1 // pred_fallthru
      _
    // Predicated region
    $region42: #{tpu_custom_call.1} parent=1 // pred_check
      _
    $region43: #{tpu_custom_call.1} parent=1 // pred_check_branch
      %133 = sbr.rel (0) target = $region45
    $region44: #{tpu_custom_call.1} parent=1 // pred_region
      %s135 = ssub.s32 16, 16
      %136 = vsyncadd [#allocation20], %s135
      %s138 = sshll.u32 %s10, 4
      %s139 = int_to_ptr.vmem [resolvable:$true] %s138
      %141 = dma.vmem_to_smem %s139, 16, [#allocation21], [#allocation20]
    $region45: #{tpu_custom_call.1} parent=1 // pred_fallthru
      _
    // Predicated region
    $region46: #{tpu_custom_call.1} parent=1 // pred_check
      _
    $region47: #{tpu_custom_call.1} parent=1 // pred_check_branch
      %143 = sbr.rel (0) target = $region49
    $region48: #{tpu_custom_call.1} parent=1 // pred_region
      _
    $region49: #{tpu_custom_call.1} parent=1 // pred_fallthru
      _
    // Predicated region
    $region50: #{tpu_custom_call.1} parent=1 // pred_check
      _
    $region51: #{tpu_custom_call.1} parent=1 // pred_check_branch
      %145 = sbr.rel (0) target = $region53
    $region52: #{tpu_custom_call.1} parent=1 // pred_region
      %s147 = ssub.s32 64, 64
      %148 = vsyncadd [#allocation23], %s147
      %s150 = sshll.u32 %s12, 4
      %s151 = int_to_ptr.vmem [resolvable:$true] %s150
      %153 = dma.vmem_to_smem %s151, 64, [#allocation22], [#allocation23]
    $region53: #{tpu_custom_call.1} parent=1 // pred_fallthru
      _
    // Predicated region
    $region54: #{tpu_custom_call.1} parent=1 // pred_check
      _
    $region55: #{tpu_custom_call.1} parent=1 // pred_check_branch
      %155 = sbr.rel (0) target = $region57
    $region56: #{tpu_custom_call.1} parent=1 // pred_region
      %156 = dma.done [#allocation4], 512
    $region57: #{tpu_custom_call.1} parent=1 // pred_fallthru
      _
    // Predicated region
    $region58: #{tpu_custom_call.1} parent=1 // pred_check
      _
    $region59: #{tpu_custom_call.1} parent=1 // pred_check_branch
      %158 = sbr.rel (0) target = $region61
    $region60: #{tpu_custom_call.1} parent=1 // pred_region
      %159 = dma.done [#allocation8], 384
    $region61: #{tpu_custom_call.1} parent=1 // pred_fallthru
      _
    // Predicated region
    $region62: #{tpu_custom_call.1} parent=1 // pred_check
      _
    $region63: #{tpu_custom_call.1} parent=1 // pred_check_branch
      %161 = sbr.rel (0) target = $region65
    $region64: #{tpu_custom_call.1} parent=1 // pred_region
      %162 = dma.done [#allocation6], 16
    $region65: #{tpu_custom_call.1} parent=1 // pred_fallthru
      _
    // Predicated region
    $region66: #{tpu_custom_call.1} parent=1 // pred_check
      _
    $region67: #{tpu_custom_call.1} parent=1 // pred_check_branch
      %164 = sbr.rel (0) target = $region69
    $region68: #{tpu_custom_call.1} parent=1 // pred_region
      %165 = dma.done [#allocation11], 16
    $region69: #{tpu_custom_call.1} parent=1 // pred_fallthru
      _
    // Predicated region
    $region70: #{tpu_custom_call.1} parent=1 // pred_check
      _
    $region71: #{tpu_custom_call.1} parent=1 // pred_check_branch
      %167 = sbr.rel (0) target = $region73
    $region72: #{tpu_custom_call.1} parent=1 // pred_region
      %168 = dma.done [#allocation11], 16
    $region73: #{tpu_custom_call.1} parent=1 // pred_fallthru
      _
    // Predicated region
    $region74: #{tpu_custom_call.1} parent=1 // pred_check
      _
    $region75: #{tpu_custom_call.1} parent=1 // pred_check_branch
      %170 = sbr.rel (0) target = $region77
    $region76: #{tpu_custom_call.1} parent=1 // pred_region
      %171 = dma.done [#allocation14], 16
    $region77: #{tpu_custom_call.1} parent=1 // pred_fallthru
      _
    // Predicated region
    $region78: #{tpu_custom_call.1} parent=1 // pred_check
      _
    $region79: #{tpu_custom_call.1} parent=1 // pred_check_branch
      %173 = sbr.rel (0) target = $region81
    $region80: #{tpu_custom_call.1} parent=1 // pred_region
      %174 = dma.done [#allocation14], 16
    $region81: #{tpu_custom_call.1} parent=1 // pred_fallthru
      _
    // Predicated region
    $region82: #{tpu_custom_call.1} parent=1 // pred_check
      _
    $region83: #{tpu_custom_call.1} parent=1 // pred_check_branch
      %176 = sbr.rel (0) target = $region85
    $region84: #{tpu_custom_call.1} parent=1 // pred_region
      %177 = dma.done [#allocation17], 16
    $region85: #{tpu_custom_call.1} parent=1 // pred_fallthru
      _
    // Predicated region
    $region86: #{tpu_custom_call.1} parent=1 // pred_check
      _
    $region87: #{tpu_custom_call.1} parent=1 // pred_check_branch
      %179 = sbr.rel (0) target = $region89
    $region88: #{tpu_custom_call.1} parent=1 // pred_region
      %180 = dma.done [#allocation17], 16
    $region89: #{tpu_custom_call.1} parent=1 // pred_fallthru
      _
    // Predicated region
    $region90: #{tpu_custom_call.1} parent=1 // pred_check
      _
    $region91: #{tpu_custom_call.1} parent=1 // pred_check_branch
      %182 = sbr.rel (0) target = $region93
    $region92: #{tpu_custom_call.1} parent=1 // pred_region
      %183 = dma.done [#allocation20], 16
    $region93: #{tpu_custom_call.1} parent=1 // pred_fallthru
      _
    // Predicated region
    $region94: #{tpu_custom_call.1} parent=1 // pred_check
      _
    $region95: #{tpu_custom_call.1} parent=1 // pred_check_branch
      %185 = sbr.rel (0) target = $region97
    $region96: #{tpu_custom_call.1} parent=1 // pred_region
      %186 = dma.done [#allocation20], 16
    $region97: #{tpu_custom_call.1} parent=1 // pred_fallthru
      _
    // Predicated region
    $region98: #{tpu_custom_call.1} parent=1 // pred_check
      _
    $region99: #{tpu_custom_call.1} parent=1 // pred_check_branch
      %188 = sbr.rel (0) target = $region101
    $region100: #{tpu_custom_call.1} parent=1 // pred_region
      %189 = dma.done [#allocation23], 64
    $region101: #{tpu_custom_call.1} parent=1 // pred_fallthru
      _
    %190 = sfence
    %v191 = vld [vmem:[#allocation3] sm:$0xff]
    %v192 = vld [vmem:[#allocation3 + $0x8] sm:$0xff]
    %v193 = vld [vmem:[#allocation3 + $0x10] sm:$0xff]
    %v194 = vld [vmem:[#allocation3 + $0x18] sm:$0xff]
    %s195 = sld [smem:[#allocation9]]
    %v196 = vstv %s195
    %v197 = vmul.f32 %v191, %v196
    %s198 = sld [smem:[#allocation10]]
    %v199 = vstv %s198
    %v200 = vadd.f32 %v197, %v199
    %s201 = sld [smem:[#allocation9 + $0x3]]
    %v202 = vstv %s201
    %v203 = vmul.f32 %v192, %v202
    %v204 = vadd.f32 %v200, %v203
    %s205 = sld [smem:[#allocation9 + $0x6]]
    %v206 = vstv %s205
    %v207 = vmul.f32 %v193, %v206
    %v208 = vadd.f32 %v204, %v207
    %s209 = sld [smem:[#allocation9 + $0x9]]
    %v210 = vstv %s209
    %v211 = vmul.f32 %v194, %v210
    %v212 = vadd.f32 %v208, %v211
    %v213 = vmax.f32 %v212, 0.0
    %s214 = sld [smem:[#allocation9 + $0x1]]
    %v215 = vstv %s214
    %v216 = vmul.f32 %v191, %v215
    %s217 = sld [smem:[#allocation10 + $0x1]]
    %v218 = vstv %s217
    %v219 = vadd.f32 %v216, %v218
    %s220 = sld [smem:[#allocation9 + $0x4]]
    %v221 = vstv %s220
    %v222 = vmul.f32 %v192, %v221
    %v223 = vadd.f32 %v219, %v222
    %s224 = sld [smem:[#allocation9 + $0x7]]
    %v225 = vstv %s224
    %v226 = vmul.f32 %v193, %v225
    %v227 = vadd.f32 %v223, %v226
    %s228 = sld [smem:[#allocation9 + $0xa]]
    %v229 = vstv %s228
    %v230 = vmul.f32 %v194, %v229
    %v231 = vadd.f32 %v227, %v230
    %v232 = vmax.f32 %v231, 0.0
    %s233 = sld [smem:[#allocation9 + $0x2]]
    %v234 = vstv %s233
    %v235 = vmul.f32 %v191, %v234
    %s236 = sld [smem:[#allocation10 + $0x2]]
    %v237 = vstv %s236
    %v238 = vadd.f32 %v235, %v237
    %s239 = sld [smem:[#allocation9 + $0x5]]
    %v240 = vstv %s239
    %v241 = vmul.f32 %v192, %v240
    %v242 = vadd.f32 %v238, %v241
    %s243 = sld [smem:[#allocation9 + $0x8]]
    %v244 = vstv %s243
    %v245 = vmul.f32 %v193, %v244
    %v246 = vadd.f32 %v242, %v245
    %s247 = sld [smem:[#allocation9 + $0xb]]
    %v248 = vstv %s247
    %v249 = vmul.f32 %v194, %v248
    %v250 = vadd.f32 %v246, %v249
    %v251 = vmax.f32 %v250, 0.0
    %s252 = sld [smem:[#allocation12]]
    %v253 = vstv %s252
    %v254 = vmul.f32 %v213, %v253
    %s255 = sld [smem:[#allocation13]]
    %v256 = vstv %s255
    %v257 = vadd.f32 %v254, %v256
    %s258 = sld [smem:[#allocation12 + $0x2]]
    %v259 = vstv %s258
    %v260 = vmul.f32 %v232, %v259
    %v261 = vadd.f32 %v257, %v260
    %s262 = sld [smem:[#allocation12 + $0x4]]
    %v263 = vstv %s262
    %v264 = vmul.f32 %v251, %v263
    %v265 = vadd.f32 %v261, %v264
    %v266 = vmax.f32 %v265, 0.0
    %s267 = sld [smem:[#allocation12 + $0x1]]
    %v268 = vstv %s267
    %v269 = vmul.f32 %v213, %v268
    %s270 = sld [smem:[#allocation13 + $0x1]]
    %v271 = vstv %s270
    %v272 = vadd.f32 %v269, %v271
    %s273 = sld [smem:[#allocation12 + $0x3]]
    %v274 = vstv %s273
    %v275 = vmul.f32 %v232, %v274
    %v276 = vadd.f32 %v272, %v275
    %s277 = sld [smem:[#allocation12 + $0x5]]
    %v278 = vstv %s277
    %v279 = vmul.f32 %v251, %v278
    %v280 = vadd.f32 %v276, %v279
    %v281 = vmax.f32 %v280, 0.0
    %v282 = vld [vmem:[#allocation7] sm:$0xff]
    %v283 = vld [vmem:[#allocation7 + $0x8] sm:$0xff]
    %v284 = vld [vmem:[#allocation7 + $0x10] sm:$0xff]
    %vm285 = vcmp.eq.s32.totalorder %v282, 0
    %s286 = sld [smem:[#allocation22]]
    %v287 = vstv %s286
    %v288 = vsel %vm285, %v287, 0.0
    %s289 = sld [smem:[#allocation22 + $0x1]]
    %v290 = vstv %s289
    %v291 = vsel %vm285, %v290, 0.0
    %vm292 = vcmp.eq.s32.totalorder %v282, 1
    %s293 = sld [smem:[#allocation22 + $0x2]]
    %v294 = vstv %s293
    %v295 = vsel %vm292, %v294, %v288
    %s296 = sld [smem:[#allocation22 + $0x3]]
    %v297 = vstv %s296
    %v298 = vsel %vm292, %v297, %v291
    %vm299 = vcmp.eq.s32.totalorder %v282, 2
    %s300 = sld [smem:[#allocation22 + $0x4]]
    %v301 = vstv %s300
    %v302 = vsel %vm299, %v301, %v295
    %s303 = sld [smem:[#allocation22 + $0x5]]
    %v304 = vstv %s303
    %v305 = vsel %vm299, %v304, %v298
    %vm306 = vcmp.eq.s32.totalorder %v282, 3
    %s307 = sld [smem:[#allocation22 + $0x6]]
    %v308 = vstv %s307
    %v309 = vsel %vm306, %v308, %v302
    %s310 = sld [smem:[#allocation22 + $0x7]]
    %v311 = vstv %s310
    %v312 = vsel %vm306, %v311, %v305
    %vm313 = vcmp.eq.s32.totalorder %v282, 4
    %s314 = sld [smem:[#allocation22 + $0x8]]
    %v315 = vstv %s314
    %v316 = vsel %vm313, %v315, %v309
    %s317 = sld [smem:[#allocation22 + $0x9]]
    %v318 = vstv %s317
    %v319 = vsel %vm313, %v318, %v312
    %vm320 = vcmp.eq.s32.totalorder %v283, 0
    %s321 = sld [smem:[#allocation22 + $0x80]]
    %v322 = vstv %s321
    %v323 = vsel %vm320, %v322, 0.0
    %s324 = sld [smem:[#allocation22 + $0x81]]
    %v325 = vstv %s324
    %v326 = vsel %vm320, %v325, 0.0
    %vm327 = vcmp.eq.s32.totalorder %v283, 1
    %s328 = sld [smem:[#allocation22 + $0x82]]
    %v329 = vstv %s328
    %v330 = vsel %vm327, %v329, %v323
    %s331 = sld [smem:[#allocation22 + $0x83]]
    %v332 = vstv %s331
    %v333 = vsel %vm327, %v332, %v326
    %vm334 = vcmp.eq.s32.totalorder %v283, 2
    %s335 = sld [smem:[#allocation22 + $0x84]]
    %v336 = vstv %s335
    %v337 = vsel %vm334, %v336, %v330
    %s338 = sld [smem:[#allocation22 + $0x85]]
    %v339 = vstv %s338
    %v340 = vsel %vm334, %v339, %v333
    %vm341 = vcmp.eq.s32.totalorder %v283, 3
    %s342 = sld [smem:[#allocation22 + $0x86]]
    %v343 = vstv %s342
    %v344 = vsel %vm341, %v343, %v337
    %s345 = sld [smem:[#allocation22 + $0x87]]
    %v346 = vstv %s345
    %v347 = vsel %vm341, %v346, %v340
    %vm348 = vcmp.eq.s32.totalorder %v283, 4
    %s349 = sld [smem:[#allocation22 + $0x88]]
    %v350 = vstv %s349
    %v351 = vsel %vm348, %v350, %v344
    %s352 = sld [smem:[#allocation22 + $0x89]]
    %v353 = vstv %s352
    %v354 = vsel %vm348, %v353, %v347
    %vm355 = vcmp.eq.s32.totalorder %v283, 5
    %s356 = sld [smem:[#allocation22 + $0x8a]]
    %v357 = vstv %s356
    %v358 = vsel %vm355, %v357, %v351
    %s359 = sld [smem:[#allocation22 + $0x8b]]
    %v360 = vstv %s359
    %v361 = vsel %vm355, %v360, %v354
    %vm362 = vcmp.eq.s32.totalorder %v283, 6
    %s363 = sld [smem:[#allocation22 + $0x8c]]
    %v364 = vstv %s363
    %v365 = vsel %vm362, %v364, %v358
    %s366 = sld [smem:[#allocation22 + $0x8d]]
    %v367 = vstv %s366
    %v368 = vsel %vm362, %v367, %v361
    %vm369 = vcmp.eq.s32.totalorder %v284, 0
    %s370 = sld [smem:[#allocation22 + $0x100]]
    %v371 = vstv %s370
    %v372 = vsel %vm369, %v371, 0.0
    %s373 = sld [smem:[#allocation22 + $0x101]]
    %v374 = vstv %s373
    %v375 = vsel %vm369, %v374, 0.0
    %vm376 = vcmp.eq.s32.totalorder %v284, 1
    %s377 = sld [smem:[#allocation22 + $0x102]]
    %v378 = vstv %s377
    %v379 = vsel %vm376, %v378, %v372
    %s380 = sld [smem:[#allocation22 + $0x103]]
    %v381 = vstv %s380
    %v382 = vsel %vm376, %v381, %v375
    %vm383 = vcmp.eq.s32.totalorder %v284, 2
    %s384 = sld [smem:[#allocation22 + $0x104]]
    %v385 = vstv %s384
    %v386 = vsel %vm383, %v385, %v379
    %s387 = sld [smem:[#allocation22 + $0x105]]
    %v388 = vstv %s387
    %v389 = vsel %vm383, %v388, %v382
    %vm390 = vcmp.eq.s32.totalorder %v284, 3
    %s391 = sld [smem:[#allocation22 + $0x106]]
    %v392 = vstv %s391
    %v393 = vsel %vm390, %v392, %v386
    %s394 = sld [smem:[#allocation22 + $0x107]]
    %v395 = vstv %s394
    %v396 = vsel %vm390, %v395, %v389
    %vm397 = vcmp.eq.s32.totalorder %v284, 4
    %s398 = sld [smem:[#allocation22 + $0x108]]
    %v399 = vstv %s398
    %v400 = vsel %vm397, %v399, %v393
    %s401 = sld [smem:[#allocation22 + $0x109]]
    %v402 = vstv %s401
    %v403 = vsel %vm397, %v402, %v396
    %vm404 = vcmp.eq.s32.totalorder %v284, 5
    %s405 = sld [smem:[#allocation22 + $0x10a]]
    %v406 = vstv %s405
    %v407 = vsel %vm404, %v406, %v400
    %s408 = sld [smem:[#allocation22 + $0x10b]]
    %v409 = vstv %s408
    %v410 = vsel %vm404, %v409, %v403
    %vm411 = vcmp.eq.s32.totalorder %v284, 6
    %s412 = sld [smem:[#allocation22 + $0x10c]]
    %v413 = vstv %s412
    %v414 = vsel %vm411, %v413, %v407
    %s415 = sld [smem:[#allocation22 + $0x10d]]
    %v416 = vstv %s415
    %v417 = vsel %vm411, %v416, %v410
    %vm418 = vcmp.eq.s32.totalorder %v284, 7
    %s419 = sld [smem:[#allocation22 + $0x10e]]
    %v420 = vstv %s419
    %v421 = vsel %vm418, %v420, %v414
    %s422 = sld [smem:[#allocation22 + $0x10f]]
    %v423 = vstv %s422
    %v424 = vsel %vm418, %v423, %v417
    %vm425 = vcmp.eq.s32.totalorder %v284, 8
    %s426 = sld [smem:[#allocation22 + $0x110]]
    %v427 = vstv %s426
    %v428 = vsel %vm425, %v427, %v421
    %s429 = sld [smem:[#allocation22 + $0x111]]
    %v430 = vstv %s429
    %v431 = vsel %vm425, %v430, %v424
    %vm432 = vcmp.eq.s32.totalorder %v284, 9
    %s433 = sld [smem:[#allocation22 + $0x112]]
    %v434 = vstv %s433
    %v435 = vsel %vm432, %v434, %v428
    %s436 = sld [smem:[#allocation22 + $0x113]]
    %v437 = vstv %s436
    %v438 = vsel %vm432, %v437, %v431
    %vm439 = vcmp.eq.s32.totalorder %v284, 10
    %s440 = sld [smem:[#allocation22 + $0x114]]
    %v441 = vstv %s440
    %v442 = vsel %vm439, %v441, %v435
    %s443 = sld [smem:[#allocation22 + $0x115]]
    %v444 = vstv %s443
    %v445 = vsel %vm439, %v444, %v438
    %s446 = sld [smem:[#allocation15]]
    %v447 = vstv %s446
    %v448 = vmul.f32 %v266, %v447
    %s449 = sld [smem:[#allocation16]]
    %v450 = vstv %s449
    %v451 = vadd.f32 %v448, %v450
    %s452 = sld [smem:[#allocation15 + $0x4]]
    %v453 = vstv %s452
    %v454 = vmul.f32 %v281, %v453
    %v455 = vadd.f32 %v451, %v454
    %s456 = sld [smem:[#allocation15 + $0x8]]
    %v457 = vstv %s456
    %v458 = vmul.f32 %v316, %v457
    %v459 = vadd.f32 %v455, %v458
    %s460 = sld [smem:[#allocation15 + $0xc]]
    %v461 = vstv %s460
    %v462 = vmul.f32 %v319, %v461
    %v463 = vadd.f32 %v459, %v462
    %s464 = sld [smem:[#allocation15 + $0x10]]
    %v465 = vstv %s464
    %v466 = vmul.f32 %v365, %v465
    %v467 = vadd.f32 %v463, %v466
    %s468 = sld [smem:[#allocation15 + $0x14]]
    %v469 = vstv %s468
    %v470 = vmul.f32 %v368, %v469
    %v471 = vadd.f32 %v467, %v470
    %s472 = sld [smem:[#allocation15 + $0x18]]
    %v473 = vstv %s472
    %v474 = vmul.f32 %v442, %v473
    %v475 = vadd.f32 %v471, %v474
    %s476 = sld [smem:[#allocation15 + $0x1c]]
    %v477 = vstv %s476
    %v478 = vmul.f32 %v445, %v477
    %v479 = vadd.f32 %v475, %v478
    %v480 = vmax.f32 %v479, 0.0
    %s481 = sld [smem:[#allocation15 + $0x1]]
    %v482 = vstv %s481
    %v483 = vmul.f32 %v266, %v482
    %s484 = sld [smem:[#allocation16 + $0x1]]
    %v485 = vstv %s484
    %v486 = vadd.f32 %v483, %v485
    %s487 = sld [smem:[#allocation15 + $0x5]]
    %v488 = vstv %s487
    %v489 = vmul.f32 %v281, %v488
    %v490 = vadd.f32 %v486, %v489
    %s491 = sld [smem:[#allocation15 + $0x9]]
    %v492 = vstv %s491
    %v493 = vmul.f32 %v316, %v492
    %v494 = vadd.f32 %v490, %v493
    %s495 = sld [smem:[#allocation15 + $0xd]]
    %v496 = vstv %s495
    %v497 = vmul.f32 %v319, %v496
    %v498 = vadd.f32 %v494, %v497
    %s499 = sld [smem:[#allocation15 + $0x11]]
    %v500 = vstv %s499
    %v501 = vmul.f32 %v365, %v500
    %v502 = vadd.f32 %v498, %v501
    %s503 = sld [smem:[#allocation15 + $0x15]]
    %v504 = vstv %s503
    %v505 = vmul.f32 %v368, %v504
    %v506 = vadd.f32 %v502, %v505
    %s507 = sld [smem:[#allocation15 + $0x19]]
    %v508 = vstv %s507
    %v509 = vmul.f32 %v442, %v508
    %v510 = vadd.f32 %v506, %v509
    %s511 = sld [smem:[#allocation15 + $0x1d]]
    %v512 = vstv %s511
    %v513 = vmul.f32 %v445, %v512
    %v514 = vadd.f32 %v510, %v513
    %v515 = vmax.f32 %v514, 0.0
    %s516 = sld [smem:[#allocation15 + $0x2]]
    %v517 = vstv %s516
    %v518 = vmul.f32 %v266, %v517
    %s519 = sld [smem:[#allocation16 + $0x2]]
    %v520 = vstv %s519
    %v521 = vadd.f32 %v518, %v520
    %s522 = sld [smem:[#allocation15 + $0x6]]
    %v523 = vstv %s522
    %v524 = vmul.f32 %v281, %v523
    %v525 = vadd.f32 %v521, %v524
    %s526 = sld [smem:[#allocation15 + $0xa]]
    %v527 = vstv %s526
    %v528 = vmul.f32 %v316, %v527
    %v529 = vadd.f32 %v525, %v528
    %s530 = sld [smem:[#allocation15 + $0xe]]
    %v531 = vstv %s530
    %v532 = vmul.f32 %v319, %v531
    %v533 = vadd.f32 %v529, %v532
    %s534 = sld [smem:[#allocation15 + $0x12]]
    %v535 = vstv %s534
    %v536 = vmul.f32 %v365, %v535
    %v537 = vadd.f32 %v533, %v536
    %s538 = sld [smem:[#allocation15 + $0x16]]
    %v539 = vstv %s538
    %v540 = vmul.f32 %v368, %v539
    %v541 = vadd.f32 %v537, %v540
    %s542 = sld [smem:[#allocation15 + $0x1a]]
    %v543 = vstv %s542
    %v544 = vmul.f32 %v442, %v543
    %v545 = vadd.f32 %v541, %v544
    %s546 = sld [smem:[#allocation15 + $0x1e]]
    %v547 = vstv %s546
    %v548 = vmul.f32 %v445, %v547
    %v549 = vadd.f32 %v545, %v548
    %v550 = vmax.f32 %v549, 0.0
    %s551 = sld [smem:[#allocation15 + $0x3]]
    %v552 = vstv %s551
    %v553 = vmul.f32 %v266, %v552
    %s554 = sld [smem:[#allocation16 + $0x3]]
    %v555 = vstv %s554
    %v556 = vadd.f32 %v553, %v555
    %s557 = sld [smem:[#allocation15 + $0x7]]
    %v558 = vstv %s557
    %v559 = vmul.f32 %v281, %v558
    %v560 = vadd.f32 %v556, %v559
    %s561 = sld [smem:[#allocation15 + $0xb]]
    %v562 = vstv %s561
    %v563 = vmul.f32 %v316, %v562
    %v564 = vadd.f32 %v560, %v563
    %s565 = sld [smem:[#allocation15 + $0xf]]
    %v566 = vstv %s565
    %v567 = vmul.f32 %v319, %v566
    %v568 = vadd.f32 %v564, %v567
    %s569 = sld [smem:[#allocation15 + $0x13]]
    %v570 = vstv %s569
    %v571 = vmul.f32 %v365, %v570
    %v572 = vadd.f32 %v568, %v571
    %s573 = sld [smem:[#allocation15 + $0x17]]
    %v574 = vstv %s573
    %v575 = vmul.f32 %v368, %v574
    %v576 = vadd.f32 %v572, %v575
    %s577 = sld [smem:[#allocation15 + $0x1b]]
    %v578 = vstv %s577
    %v579 = vmul.f32 %v442, %v578
    %v580 = vadd.f32 %v576, %v579
    %s581 = sld [smem:[#allocation15 + $0x1f]]
    %v582 = vstv %s581
    %v583 = vmul.f32 %v445, %v582
    %v584 = vadd.f32 %v580, %v583
    %v585 = vmax.f32 %v584, 0.0
    %s586 = sld [smem:[#allocation18]]
    %v587 = vstv %s586
    %v588 = vmul.f32 %v480, %v587
    %s589 = sld [smem:[#allocation19]]
    %v590 = vstv %s589
    %v591 = vadd.f32 %v588, %v590
    %s592 = sld [smem:[#allocation18 + $0x2]]
    %v593 = vstv %s592
    %v594 = vmul.f32 %v515, %v593
    %v595 = vadd.f32 %v591, %v594
    %s596 = sld [smem:[#allocation18 + $0x4]]
    %v597 = vstv %s596
    %v598 = vmul.f32 %v550, %v597
    %v599 = vadd.f32 %v595, %v598
    %s600 = sld [smem:[#allocation18 + $0x6]]
    %v601 = vstv %s600
    %v602 = vmul.f32 %v585, %v601
    %v603 = vadd.f32 %v599, %v602
    %v604 = vmax.f32 %v603, 0.0
    %s605 = sld [smem:[#allocation18 + $0x1]]
    %v606 = vstv %s605
    %v607 = vmul.f32 %v480, %v606
    %s608 = sld [smem:[#allocation19 + $0x1]]
    %v609 = vstv %s608
    %v610 = vadd.f32 %v607, %v609
    %s611 = sld [smem:[#allocation18 + $0x3]]
    %v612 = vstv %s611
    %v613 = vmul.f32 %v515, %v612
    %v614 = vadd.f32 %v610, %v613
    %s615 = sld [smem:[#allocation18 + $0x5]]
    %v616 = vstv %s615
    %v617 = vmul.f32 %v550, %v616
    %v618 = vadd.f32 %v614, %v617
    %s619 = sld [smem:[#allocation18 + $0x7]]
    %v620 = vstv %s619
    %v621 = vmul.f32 %v585, %v620
    %v622 = vadd.f32 %v618, %v621
    %v623 = vmax.f32 %v622, 0.0
    %s624 = sld [smem:[#allocation21]]
    %v625 = vstv %s624
    %v626 = vmul.f32 %v604, %v625
    %s627 = sld [smem:[#allocation2]]
    %v628 = vstv %s627
    %v629 = vadd.f32 %v626, %v628
    %s630 = sld [smem:[#allocation21 + $0x1]]
    %v631 = vstv %s630
    %v632 = vmul.f32 %v623, %v631
    %v633 = vadd.f32 %v629, %v632
    %v634 = vxor.u32 %v633, 2147483648
    %v635 = vmul.f32 %v634, 1.442695
    %v636 = vpow.pop %v635
    %v637 = vadd.f32 %v636, 1.0
    %v638 = vrcp.pop %v637
    %v639 = vmul.f32 1.0, %v638
    %640 = vst [vmem:[#allocation24] sm:$0xff] %v639
    // Predicated region
    $region102: #{tpu_custom_call.1} parent=1 // pred_check
      _
    $region103: #{tpu_custom_call.1} parent=1 // pred_check_branch
      %642 = sbr.rel (0) target = $region105
    $region104: #{tpu_custom_call.1} parent=1 // pred_region
      %s644 = ssub.s32 128, 128
      %645 = vsyncadd [#allocation5], %s644
      %s647 = sshll.u32 [#allocation24], 4
      %s648 = int_to_ptr.vmem [resolvable:$true] %s647
      %650 = dma.vmem_to_hbm [thread:$0]  %s648, 128, %s13, [#allocation5]
    $region105: #{tpu_custom_call.1} parent=1 // pred_fallthru
      _
    // Predicated region
    $region106: #{tpu_custom_call.1} parent=1 // pred_check
      _
    $region107: #{tpu_custom_call.1} parent=1 // pred_check_branch
      %652 = sbr.rel (0) target = $region109
    $region108: #{tpu_custom_call.1} parent=1 // pred_region
      %653 = dma.done [#allocation5], 128
    $region109: #{tpu_custom_call.1} parent=1 // pred_fallthru
      _
    %654 = vsyncpa [#allocation4], 1
    %655 = vsyncpa [#allocation8], 1
    %656 = vsyncpa [#allocation5], 1
    %657 = vsyncpa [#allocation6], 1
    %658 = vsyncpa [#allocation11], 1
    %659 = vsyncpa [#allocation14], 1
    %660 = vsyncpa [#allocation17], 1
    %661 = vsyncpa [#allocation20], 1
    %662 = vsyncpa [#allocation23], 1

</llo_original>
